<compile_context>
chip_gen: v7x
topology: tpu7x:2x2x1
jax: 0.10.0
libtpu: 0.0.40
codegen_flags: <defaults>
</compile_context>

<pallas_src>
import functools
import math

import jax
import jax.numpy as jnp
from jax.experimental import pallas as pl
from jax.experimental.pallas import tpu as pltpu


# ----------------------------------------------------------------------------
# small helpers
# ----------------------------------------------------------------------------

def _ceil_to(x, m):
    return pl.cdiv(x, m) * m


def _largest_divisor(n, candidates):
    for c in candidates:
        if n % c == 0:
            return c
    return n


_VMEM_LIMIT = 32 * 1024 * 1024   # safe on v5e / v6e / v7x


# ----------------------------------------------------------------------------
# Pallas kernels
# ----------------------------------------------------------------------------

def _matmul_kernel(*refs, activation, has_residual):
    """Tiled GEMM: bf16 operands, f32 VMEM scratch accumulation, bf16 output.

    Epilogue (last k step) fuses bias add, optional GELU and optional residual
    add (residual arrives bf16, upcast here).  NOTE: residual is added after the
    activation; no current call site uses both together.
    """
    if has_residual:
        a_ref, b_ref, bias_ref, res_ref, o_ref, acc_ref = refs
    else:
        a_ref, b_ref, bias_ref, o_ref, acc_ref = refs
        res_ref = None

    k = pl.program_id(2)

    @pl.when(k == 0)
    def _():
        acc_ref[...] = jnp.zeros_like(acc_ref)

    acc_ref[...] += jnp.dot(a_ref[...], b_ref[...],
                            preferred_element_type=jnp.float32)

    @pl.when(k == pl.num_programs(2) - 1)
    def _():
        out = acc_ref[...] + bias_ref[...]
        if activation == "gelu":
            out = jax.nn.gelu(out)
        if has_residual:
            out = out + res_ref[...].astype(jnp.float32)
        o_ref[...] = out.astype(o_ref.dtype)


def _layernorm_kernel(x_ref, g_ref, b_ref, o_ref):
    x = x_ref[...].astype(jnp.float32)
    mean = jnp.mean(x, axis=-1, keepdims=True)
    var = jnp.mean((x - mean) ** 2, axis=-1, keepdims=True)
    y = (x - mean) * jax.lax.rsqrt(var + 1e-5)
    o_ref[...] = (y * g_ref[...] + b_ref[...]).astype(o_ref.dtype)


def _attention_kernel(q_ref, k_ref, v_ref, bias_ref, o_ref, *, scale, dh, hpb):
    """Softmax attention with additive relative-position bias.

    Each grid step handles one batch element and `hpb` heads packed side by side
    (lane-dense channel block).  QK^T and P@V run with bf16 MXU operands and f32
    accumulation; softmax math stays in f32; scale is applied to the f32 logits.
    Each head's output is written directly into its lane slice of o_ref (no
    concat materialization); output layout is (B, S, C) head-major.
    """
    for h in range(hpb):
        sl = slice(h * dh, (h + 1) * dh)
        q = q_ref[0, :, sl]                       # bf16
        k = k_ref[0, :, sl]                       # bf16
        v = v_ref[0, :, sl]                       # bf16
        s = jax.lax.dot_general(q, k, (((1,), (1,)), ((), ())),
                                preferred_element_type=jnp.float32)
        s = s * scale + bias_ref[h].astype(jnp.float32)
        s = s - jnp.max(s, axis=-1, keepdims=True)
        p = jnp.exp(s)
        p = p * pl.reciprocal(jnp.sum(p, axis=-1, keepdims=True), approx=True)
        out_h = jnp.dot(p.astype(jnp.bfloat16), v,
                        preferred_element_type=jnp.float32)
        o_ref[0, :, sl] = out_h.astype(o_ref.dtype)


# ----------------------------------------------------------------------------
# Pallas wrappers
# ----------------------------------------------------------------------------

def matmul_pallas(a, lin, activation=None, residual=None):
    """out = act(A @ W + b) [+ residual].  A/residual bf16, W/b pre-packed, out bf16."""
    M, K = a.shape
    w, bias = lin["w"], lin["b"]
    Kp, Np = w.shape
    N = lin["n"]

    if a.dtype != jnp.bfloat16:
        a = a.astype(jnp.bfloat16)

    # ---- tile selection (MXU / lane aligned, VMEM-aware) ----
    Mp = _ceil_to(M, 8)
    tm = _largest_divisor(Mp, (512, 256, 128, 64, 32, 16, 8))
    if Mp // tm >= 2:
        tn = _largest_divisor(Np, (512, 256, 128))
    else:
        # single M tile: keep >=2 N tiles when possible so both v7x TCs get work
        tn = _largest_divisor(Np, (256, 128)) if Np >= 256 else Np
    tk = _largest_divisor(Kp, (512, 384, 256, 128))

    # K padding is folded into im2col / pre-packed weights; this pad is a cold
    # fallback only (never triggers on the standard shapes).
    if Mp != M or Kp != K:
        a = jnp.pad(a, ((0, Mp - M), (0, Kp - K)))

    has_res = residual is not None
    inputs = [a, w, bias]
    in_specs = [
        pl.BlockSpec((tm, tk), lambda i, j, k: (i, k)),
        pl.BlockSpec((tk, tn), lambda i, j, k: (k, j)),
        pl.BlockSpec((1, tn), lambda i, j, k: (0, j)),
    ]
    bytes_accessed = Mp * Kp * 2 + Kp * Np * 2 + Np * 4 + Mp * Np * 2
    if has_res:
        r = residual
        if r.dtype != jnp.bfloat16:
            r = r.astype(jnp.bfloat16)
        rM, rN = r.shape
        if rM != Mp or rN != Np:
            r = jnp.pad(r, ((0, Mp - rM), (0, Np - rN)))
        inputs.append(r)
        in_specs.append(pl.BlockSpec((tm, tn), lambda i, j, k: (i, j)))
        bytes_accessed += Mp * Np * 2

    kernel = functools.partial(_matmul_kernel, activation=activation,
                               has_residual=has_res)
    out = pl.pallas_call(
        kernel,
        out_shape=jax.ShapeDtypeStruct((Mp, Np), jnp.bfloat16),
        grid_spec=pltpu.PrefetchScalarGridSpec(
            num_scalar_prefetch=0,
            grid=(Mp // tm, Np // tn, Kp // tk),
            in_specs=in_specs,
            out_specs=pl.BlockSpec((tm, tn), lambda i, j, k: (i, j)),
            scratch_shapes=[pltpu.VMEM((tm, tn), jnp.float32)],
        ),
        compiler_params=pltpu.CompilerParams(
            dimension_semantics=("parallel", "parallel", "arbitrary"),
            vmem_limit_bytes=_VMEM_LIMIT),
        cost_estimate=pl.CostEstimate(
            flops=2 * Mp * Np * Kp,
            transcendentals=(Mp * Np if activation == "gelu" else 0),
            bytes_accessed=bytes_accessed),
    )(*inputs)
    if Mp != M or Np != N:
        out = out[:M, :N]
    return out


def layernorm_pallas(x, gamma, beta):
    M, C = x.shape
    if M >= 256:
        tr = 256
        Mp = _ceil_to(M, tr)
    else:
        Mp = _ceil_to(M, 8)
        tr = Mp
    x_p = jnp.pad(x, ((0, Mp - M), (0, 0))) if Mp != M else x
    out = pl.pallas_call(
        _layernorm_kernel,
        out_shape=jax.ShapeDtypeStruct((Mp, C), jnp.bfloat16),
        grid_spec=pltpu.PrefetchScalarGridSpec(
            num_scalar_prefetch=0,
            grid=(Mp // tr,),
            in_specs=[
                pl.BlockSpec((tr, C), lambda i: (i, 0)),
                pl.BlockSpec((1, C), lambda i: (0, 0)),
                pl.BlockSpec((1, C), lambda i: (0, 0)),
            ],
            out_specs=pl.BlockSpec((tr, C), lambda i: (i, 0)),
        ),
        compiler_params=pltpu.CompilerParams(
            dimension_semantics=("parallel",),
            vmem_limit_bytes=_VMEM_LIMIT),
    )(x_p, gamma.reshape(1, C), beta.reshape(1, C))
    return out[:M] if Mp != M else out


def attention_pallas(qkv, rel_bias, heads, scale):
    """qkv: (B, S, 3C) fused bf16 projection (channel layout: q|k|v, head-major).

    rel_bias: (heads, S, S) f32 — shared across batch; grid is (head-group, batch)
    so the bias block is fetched once per head group and stays VMEM-resident over
    the inner batch axis.  Returns (B, S, C) bf16.
    """
    B, S, threeC = qkv.shape
    C = threeC // 3
    dh = C // heads
    assert dh <= 128 and 128 % dh == 0, "head dim must pack into 128 lanes"

    # Heads per grid step: collapse all heads into one step when the bias block
    # is small (deep / low-res stages), otherwise pack to one 128-lane group.
    if heads * S * S * 4 <= (4 << 20):
        hpb = heads
    else:
        hpb = max(1, 128 // dh)
    assert heads % hpb == 0 and (hpb * dh) % 128 == 0
    G = heads // hpb                     # number of channel blocks per q/k/v

    kernel = functools.partial(_attention_kernel, scale=scale, dh=dh, hpb=hpb)
    bytes_accessed = 3 * B * S * C * 2 + heads * S * S * 4 + B * S * C * 2
    return pl.pallas_call(
        kernel,
        out_shape=jax.ShapeDtypeStruct((B, S, C), jnp.bfloat16),
        grid_spec=pltpu.PrefetchScalarGridSpec(
            num_scalar_prefetch=0,
            grid=(G, B),
            in_specs=[
                pl.BlockSpec((1, S, dh * hpb), lambda g, b: (b, 0, g)),          # q
                pl.BlockSpec((1, S, dh * hpb), lambda g, b: (b, 0, G + g)),      # k
                pl.BlockSpec((1, S, dh * hpb), lambda g, b: (b, 0, 2 * G + g)),  # v
                pl.BlockSpec((hpb, S, S), lambda g, b: (g, 0, 0)),               # bias
            ],
            out_specs=pl.BlockSpec((1, S, dh * hpb), lambda g, b: (b, 0, g)),
        ),
        compiler_params=pltpu.CompilerParams(
            dimension_semantics=("parallel", "arbitrary"),
            vmem_limit_bytes=_VMEM_LIMIT),
        cost_estimate=pl.CostEstimate(
            flops=4 * B * heads * S * S * dh,
            transcendentals=B * heads * S * S,
            bytes_accessed=bytes_accessed),
    )(qkv, qkv, qkv, rel_bias)


# ----------------------------------------------------------------------------
# Glue (layout / patch extraction) — plain JAX
# ----------------------------------------------------------------------------

def _im2col(x_nhwc, kh, kw, stride, pad, k_pad_to=None):
    """Strided patch extraction; appends a zero slab so K is already padded to
    the pre-packed weight's K (no jnp.pad of A in the GEMM hot path)."""
    x = jnp.pad(x_nhwc, ((0, 0), (pad, pad), (pad, pad), (0, 0)))
    B, Hp, Wp, C = x.shape
    Ho = (Hp - kh) // stride + 1
    Wo = (Wp - kw) // stride + 1
    cols = []
    for i in range(kh):
        for j in range(kw):
            cols.append(x[:, i:i + stride * Ho:stride, j:j + stride * Wo:stride, :])
    K = kh * kw * C
    if k_pad_to is not None and k_pad_to > K:
        cols.append(jnp.zeros((B, Ho, Wo, k_pad_to - K), x.dtype))
        K = k_pad_to
    patches = jnp.concatenate(cols, axis=-1)            # (B, Ho, Wo, K)
    return patches.reshape(B * Ho * Wo, K), (B, Ho, Wo)


def conv2d_pallas(x_nhwc, lin, stride, pad, activation=None):
    """Conv as im2col (glue) + Pallas GEMM with pre-packed bf16 weight."""
    patches, (B, Ho, Wo) = _im2col(x_nhwc, lin["kh"], lin["kw"], stride, pad,
                                   k_pad_to=lin["w"].shape[0])
    y = matmul_pallas(patches, lin, activation=activation)
    return y.reshape(B, Ho, Wo, lin["n"])


def mbconv_stage(x_nhwc, p):
    """Strided 3x3 conv downsample + inverted-bottleneck pointwise MLP block."""
    x = conv2d_pallas(x_nhwc, p["ds"], stride=2, pad=1, activation="gelu")
    B, H, W, C = x.shape
    t = x.reshape(B * H * W, C)
    tn = layernorm_pallas(t, p["ln_g"], p["ln_b"])
    h = matmul_pallas(tn, p["w1"], activation="gelu")
    out = matmul_pallas(h, p["w2"], residual=t)          # residual fused in epilogue
    return out.reshape(B, H, W, C)


def transformer_stage(x_nhwc, p, heads):
    """Strided conv downsample + (rel-bias MHSA + MLP) transformer block."""
    x = conv2d_pallas(x_nhwc, p["ds"], stride=2, pad=1, activation="gelu")
    B, H, W, C = x.shape
    S, dh = H * W, C // heads
    t = x.reshape(B * S, C)

    # --- attention ---
    tn = layernorm_pallas(t, p["ln1_g"], p["ln1_b"])
    qkv = matmul_pallas(tn, p["qkv"]).reshape(B, S, 3 * C)
    attn = attention_pallas(qkv, p["rel_bias"], heads, scale=1.0 / math.sqrt(dh))
    t = matmul_pallas(attn.reshape(B * S, C), p["proj"], residual=t)

    # --- MLP ---
    tn2 = layernorm_pallas(t, p["ln2_g"], p["ln2_b"])
    h = matmul_pallas(tn2, p["m1"], activation="gelu")
    t = matmul_pallas(h, p["m2"], residual=t)
    return t.reshape(B, H, W, C)


# ----------------------------------------------------------------------------
# Parameter initialization (deterministic, synthetic) — weights pre-padded + bf16
# ----------------------------------------------------------------------------

class _KeyGen:
    def __init__(self, seed):
        self._key = jax.random.PRNGKey(seed)

    def __call__(self):
        self._key, k = jax.random.split(self._key)
        return k


def _w(kg, shape, fan_in):
    return (jax.random.normal(kg(), shape, jnp.float32)
            * (1.0 / math.sqrt(fan_in)))


def _pack_linear(w, b):
    K, N = w.shape
    Kp, Np = _ceil_to(K, 128), _ceil_to(N, 128)
    return {
        "w": jnp.pad(w, ((0, Kp - K), (0, Np - N))).astype(jnp.bfloat16),
        "b": jnp.pad(b, (0, Np - N)).reshape(1, Np).astype(jnp.float32),
        "k": K, "n": N,
    }


def _pack_conv(w, b):
    kh, kw, cin, cout = w.shape
    lin = _pack_linear(w.reshape(kh * kw * cin, cout), b)
    lin["kh"], lin["kw"] = kh, kw
    return lin


def _mbconv_params(kg, cin, cout, expand=4):
    return {
        "ds": _pack_conv(_w(kg, (3, 3, cin, cout), 9 * cin),
                         jnp.zeros((cout,), jnp.float32)),
        "ln_g": jnp.ones((cout,), jnp.float32),
        "ln_b": jnp.zeros((cout,), jnp.float32),
        "w1": _pack_linear(_w(kg, (cout, expand * cout), cout),
                           jnp.zeros((expand * cout,), jnp.float32)),
        "w2": _pack_linear(_w(kg, (expand * cout, cout), expand * cout),
                           jnp.zeros((cout,), jnp.float32)),
    }


def _transformer_params(kg, cin, cout, heads, seq, expand=4):
    return {
        "ds": _pack_conv(_w(kg, (3, 3, cin, cout), 9 * cin),
                         jnp.zeros((cout,), jnp.float32)),
        "ln1_g": jnp.ones((cout,), jnp.float32),
        "ln1_b": jnp.zeros((cout,), jnp.float32),
        "qkv": _pack_linear(_w(kg, (cout, 3 * cout), cout),
                            jnp.zeros((3 * cout,), jnp.float32)),
        "rel_bias": 0.02 * jax.random.normal(kg(), (heads, seq, seq), jnp.float32),
        "proj": _pack_linear(_w(kg, (cout, cout), cout),
                             jnp.zeros((cout,), jnp.float32)),
        "ln2_g": jnp.ones((cout,), jnp.float32),
        "ln2_b": jnp.zeros((cout,), jnp.float32),
        "m1": _pack_linear(_w(kg, (cout, expand * cout), cout),
                           jnp.zeros((expand * cout,), jnp.float32)),
        "m2": _pack_linear(_w(kg, (expand * cout, cout), expand * cout),
                           jnp.zeros((cout,), jnp.float32)),
    }


def init_params(seed, in_hw):
    H, W = in_hw
    kg = _KeyGen(seed)
    s3_seq = (H // 16) * (W // 16)
    s4_seq = (H // 32) * (W // 32)
    return {
        "stem": _pack_conv(_w(kg, (3, 3, 3, 128), 27),
                           jnp.zeros((128,), jnp.float32)),
        "stage1": _mbconv_params(kg, 128, 128),
        "stage2": _mbconv_params(kg, 128, 256),
        "stage3": _transformer_params(kg, 256, 512, heads=8, seq=s3_seq),
        "stage4": _transformer_params(kg, 512, 1024, heads=16, seq=s4_seq),
    }


# ----------------------------------------------------------------------------
# Forward pass (mirrors CoatNet2SMP.forward)
# ----------------------------------------------------------------------------

def coatnet2_smp_forward(x_nchw, params):
    b, c, h, w = x_nchw.shape
    dummy = jnp.zeros((b, 0, h, w), dtype=x_nchw.dtype)

    # NCHW -> NHWC, bf16 activation stream end-to-end
    x = jnp.transpose(x_nchw, (0, 2, 3, 1)).astype(jnp.bfloat16)
    f1 = conv2d_pallas(x, params["stem"], stride=2, pad=1,
                       activation="gelu")                         # stride 2, 128
    f2 = mbconv_stage(f1, params["stage1"])                       # stride 4, 128
    f3 = mbconv_stage(f2, params["stage2"])                       # stride 8, 256
    f4 = transformer_stage(f3, params["stage3"], heads=8)         # stride 16, 512
    f5 = transformer_stage(f4, params["stage4"], heads=16)        # stride 32, 1024

    feats = [jnp.transpose(f, (0, 3, 1, 2)).astype(x_nchw.dtype)
             for f in (f1, f2, f3, f4, f5)]
    return [dummy] + feats


# ----------------------------------------------------------------------------
# Main
# ----------------------------------------------------------------------------

if __name__ == "__main__":
    B, C, H, W = 2, 3, 64, 64        # small spatial; 32 must divide H, W
    key = jax.random.PRNGKey(0)
    x = jax.random.normal(key, (B, C, H, W), dtype=jnp.float32)

    params = init_params(seed=0, in_hw=(H, W))
    outs = coatnet2_smp_forward(x, params)
    outs = jax.block_until_ready(outs)

    expected_channels = [0, 128, 128, 256, 512, 1024]
    expected_strides = [1, 2, 4, 8, 16, 32]
    for o, ch, s in zip(outs, expected_channels, expected_strides):
        assert o.shape == (B, ch, H // s, W // s), (o.shape, ch, s)
        assert o.dtype == x.dtype
        assert bool(jnp.all(jnp.isfinite(o)))

    print("KERNEL_OK")
</pallas_src>

<mosaic_0001>
module attributes {stable_mosaic.version = 11 : i64} {
  func.func @_matmul_kernel(%arg0: i32, %arg1: i32, %arg2: i32, %arg3: memref<512x128xbf16, #tpu.memory_space<vmem>>, %arg4: memref<128x128xbf16, #tpu.memory_space<vmem>>, %arg5: memref<1x128xf32, #tpu.memory_space<vmem>>, %arg6: memref<512x128xbf16, #tpu.memory_space<vmem>>, %arg7: memref<512x128xf32, #tpu.memory_space<vmem>>) attributes {dimension_semantics = [#tpu.dimension_semantics<parallel>, #tpu.dimension_semantics<parallel>, #tpu.dimension_semantics<arbitrary>], iteration_bounds = array<i64: 4, 1, 1>, scalar_prefetch = 0 : i64, scratch_operands = 1 : i64, tpu.core_type = #tpu.core_type<tc>, window_params = [{transform_indices = @transform_0, window_bounds = array<i64: 512, 128>}, {transform_indices = @transform_1, window_bounds = array<i64: 128, 128>}, {transform_indices = @transform_2, window_bounds = array<i64: 1, 128>}, {transform_indices = @transform_3, window_bounds = array<i64: 512, 128>}]} {
    %c0_i32 = arith.constant 0 : i32
    %0 = arith.cmpi eq, %arg2, %c0_i32 : i32
    %1 = arith.extui %0 : i1 to i32
    %c0_i32_0 = arith.constant 0 : i32
    %2 = arith.cmpi ne, %1, %c0_i32_0 : i32
    scf.if %2 {
      %cst_10 = arith.constant 0.000000e+00 : f32
      %12 = vector.broadcast %cst_10 : f32 to vector<512x128xf32>
      %c0_11 = arith.constant 0 : index
      %c0_12 = arith.constant 0 : index
      %13 = vector.load %arg7[%c0_11, %c0_12] : memref<512x128xf32, #tpu.memory_space<vmem>>, vector<512x128xf32>
      tpu.vector_store %arg7[%c0_11, %c0_12], %12 {strides = array<i32>} : memref<512x128xf32, #tpu.memory_space<vmem>>, vector<512x128xf32>,
    } else {
    }
    %c0 = arith.constant 0 : index
    %c0_1 = arith.constant 0 : index
    %3 = vector.load %arg7[%c0, %c0_1] : memref<512x128xf32, #tpu.memory_space<vmem>>, vector<512x128xf32>
    %c0_2 = arith.constant 0 : index
    %c0_3 = arith.constant 0 : index
    %4 = vector.load %arg3[%c0_2, %c0_3] : memref<512x128xbf16, #tpu.memory_space<vmem>>, vector<512x128xbf16>
    %c0_4 = arith.constant 0 : index
    %c0_5 = arith.constant 0 : index
    %5 = vector.load %arg4[%c0_4, %c0_5] : memref<128x128xbf16, #tpu.memory_space<vmem>>, vector<128x128xbf16>
    %cst = arith.constant dense<0.000000e+00> : vector<512x128xf32>
    %6 = tpu.matmul %4, %5, %cst {dimension_numbers = #tpu.dot_dimension_numbers<[1], [0], [0], [1], [0, 0, 1, 1], [], []>} : vector<512x128xbf16>, vector<128x128xbf16>, vector<512x128xf32> -> vector<512x128xf32>
    %7 = arith.addf %3, %6 : vector<512x128xf32>
    %c0_6 = arith.constant 0 : index
    %c0_7 = arith.constant 0 : index
    %8 = vector.load %arg7[%c0_6, %c0_7] : memref<512x128xf32, #tpu.memory_space<vmem>>, vector<512x128xf32>
    tpu.vector_store %arg7[%c0_6, %c0_7], %7 {strides = array<i32>} : memref<512x128xf32, #tpu.memory_space<vmem>>, vector<512x128xf32>,
    %c0_i32_8 = arith.constant 0 : i32
    %9 = arith.cmpi eq, %arg2, %c0_i32_8 : i32
    %10 = arith.extui %9 : i1 to i32
    %c0_i32_9 = arith.constant 0 : i32
    %11 = arith.cmpi ne, %10, %c0_i32_9 : i32
    scf.if %11 {
      %c0_10 = arith.constant 0 : index
      %c0_11 = arith.constant 0 : index
      %12 = vector.load %arg7[%c0_10, %c0_11] : memref<512x128xf32, #tpu.memory_space<vmem>>, vector<512x128xf32>
      %c0_12 = arith.constant 0 : index
      %c0_13 = arith.constant 0 : index
      %13 = vector.load %arg5[%c0_12, %c0_13] : memref<1x128xf32, #tpu.memory_space<vmem>>, vector<1x128xf32>
      %14 = vector.broadcast %13 : vector<1x128xf32> to vector<512x128xf32>
      %15 = arith.addf %12, %14 : vector<512x128xf32>
      %16 = arith.mulf %15, %15 : vector<512x128xf32>
      %17 = arith.mulf %15, %16 : vector<512x128xf32>
      %cst_14 = arith.constant 4.471500e-02 : f32
      %18 = vector.broadcast %cst_14 : f32 to vector<512x128xf32>
      %19 = arith.mulf %18, %17 : vector<512x128xf32>
      %20 = arith.addf %15, %19 : vector<512x128xf32>
      %cst_15 = arith.constant 0.797884583 : f32
      %21 = vector.broadcast %cst_15 : f32 to vector<512x128xf32>
      %22 = arith.mulf %21, %20 : vector<512x128xf32>
      %23 = math.tanh %22 : vector<512x128xf32>
      %cst_16 = arith.constant 1.000000e+00 : f32
      %24 = vector.broadcast %cst_16 : f32 to vector<512x128xf32>
      %25 = arith.addf %24, %23 : vector<512x128xf32>
      %cst_17 = arith.constant 5.000000e-01 : f32
      %26 = vector.broadcast %cst_17 : f32 to vector<512x128xf32>
      %27 = arith.mulf %26, %25 : vector<512x128xf32>
      %28 = arith.mulf %15, %27 : vector<512x128xf32>
      %29 = arith.truncf %28 : vector<512x128xf32> to vector<512x128xbf16>
      %c0_18 = arith.constant 0 : index
      %c0_19 = arith.constant 0 : index
      %30 = vector.load %arg6[%c0_18, %c0_19] : memref<512x128xbf16, #tpu.memory_space<vmem>>, vector<512x128xbf16>
      tpu.vector_store %arg6[%c0_18, %c0_19], %29 {strides = array<i32>} : memref<512x128xbf16, #tpu.memory_space<vmem>>, vector<512x128xbf16>,
    } else {
    }
    return
  }
  func.func @transform_0(%arg0: i32, %arg1: i32, %arg2: i32) -> (i32, i32) {
    %c0_i32 = arith.constant 0 : i32
    return %arg0, %arg2 : i32, i32
  }
  func.func @transform_1(%arg0: i32, %arg1: i32, %arg2: i32) -> (i32, i32) {
    %c0_i32 = arith.constant 0 : i32
    return %arg2, %arg1 : i32, i32
  }
  func.func @transform_2(%arg0: i32, %arg1: i32, %arg2: i32) -> (i32, i32) {
    %c0_i32 = arith.constant 0 : i32
    %c0_i32_0 = arith.constant 0 : i32
    return %c0_i32, %arg1 : i32, i32
  }
  func.func @transform_3(%arg0: i32, %arg1: i32, %arg2: i32) -> (i32, i32) {
    %c0_i32 = arith.constant 0 : i32
    return %arg0, %arg1 : i32, i32
  }
}

</mosaic_0001>

<llo_original>
// kernel: tpu_custom_call.1
$region0: #{tpu_custom_call.1}
  #allocation0 [shape = 'u32[]', space=smem, size = 0x4, offset = 0x4, fixed_abs, tag = 'smem constant byte address 0x4 - core index']
  #allocation1 [shape = 'u32[144,128]{1,0:T(1,128)}', space=vmem, size = 0x12000, scoped, tag = 'internal scratch']
  #allocation2 [shape = 'f32[512,128]{1,0:T(8,128)}', space=vmem, size = 0x40000, scoped, tag = 'scratch operand']
  %s0 = inlined_call_operand.hbm [shape: bf16[2048,128], index: 0, kind: input, shape index: {}]
  %s1 = inlined_call_operand.hbm [shape: bf16[128,128], index: 1, kind: input, shape index: {}]
  %s2 = inlined_call_operand.vmem [shape: f32[1,128], index: 2, kind: input, shape index: {}]
  %s3 = inlined_call_operand.hbm [shape: bf16[2048,128], index: 3, kind: output, shape index: {}]
  %s4 = sld [smem:[#allocation0]]
  $region61: #{tpu_custom_call.1} parent=0
    _
  %s6 = ssub.s32 1, %s4
  %s7 = scalar_select 0, %s6, %s4
  $region1: #{tpu_custom_call.1} parent=0
    #allocation3 [shape = 'u8[262144]{0}', space=vmem, size = 0x40000, scoped, tag = 'input window, operand 0']
    #allocation4 [shape = 's32[2]{0}', space=sflag, size = 0x8, scoped, tag = 'scoped memory for tpu_custom_call.1']
    #allocation5 [shape = 's32[2]{0}', space=sflag, size = 0x8, scoped, tag = 'scoped memory for tpu_custom_call.1']
    #allocation6 [shape = 'u8[32768]{0}', space=vmem, size = 0x8000, scoped, tag = 'input window, operand 1, single buffered']
    #allocation7 [shape = 's32[1]{0}', space=sflag, size = 0x4, scoped, tag = 'scoped memory for tpu_custom_call.1']
    #allocation8 [shape = 'u8[262144]{0}', space=vmem, size = 0x40000, scoped, tag = 'output window, operand 0']
    %8 = vsyncpa [#allocation4], 0
    %s9 = scalar_lea.sflag [#allocation4], 1
    %10 = vsyncpa %s9, 0
    %11 = vsyncpa [#allocation7], 0
    %12 = vsyncpa [#allocation5], 0
    %s13 = scalar_lea.sflag [#allocation5], 1
    %14 = vsyncpa %s13, 0
    loop: start=0, step=1, limit=6
    $region2: #{tpu_custom_call.1} parent=1 // loop_pre_header
      _
    $region3: #{tpu_custom_call.1} parent=1 // loop_header
      %s16 = sphi 0, %s20
      %p17 = scmp.ge.s32.totalorder %s16, 6
      %s23 = sphi 0, %s42
      %s24 = sphi 0, %s38
      %s25 = sphi 0, %s34
      %s26 = sphi 0, %s23
      %s27 = sphi 0, %s24
      %s28 = sphi 0, %s25
      %s29 = sphi 0, %s26
      %s30 = sphi 0, %s27
      %s31 = sphi 0, %s28
      %s47 = sphi 0, %s49
      %s50 = sphi 0, %s47
      %s51 = sphi 0, %s50
      %s67 = sphi 0, %s51
      %s75 = sphi 0, %s77
      %s78 = sphi 0, %s75
      %s79 = sphi 0, %s78
      %s95 = sphi 0, %s79
      %s101 = sphi 0, %s103
      %s104 = sphi 0, %s101
      %s105 = sphi 0, %s104
      %s121 = sphi 0, %s105
      %s129 = sphi 0, %s131
      %s132 = sphi 0, %s129
      %s133 = sphi 0, %s132
      %s149 = sphi 0, %s133
    $region4: #{tpu_custom_call.1} parent=1 // loop_header_branch
      %19 = sbr.rel (%p17) target = $region8
    $region5: #{tpu_custom_call.1} parent=1 // loop_body
      %s21 = ssub.s32 %s16, 1
      %s22 = ssub.s32 %s16, 2
      %s32 = sadd.s32 1, %s25
      %p33 = scmp.ge.s32.totalorder %s32, 1
      %s34 = scalar_select %p33, 0, %s32
      %s35 = sadd.s32 1, %s24
      %s36 = scalar_select %p33, %s35, %s24
      %p37 = scmp.ge.s32.totalorder %s36, 1
      %s38 = scalar_select %p37, 0, %s36
      %s39 = sadd.s32 1, %s23
      %s40 = scalar_select %p37, %s39, %s23
      %p41 = scmp.ge.s32.totalorder %s40, 4
      %s42 = scalar_select %p41, 0, %s40
      %s43 = ssub.s32 %s23, %s42
      %s44 = ssub.s32 %s25, %s34
      %s45 = sor.u32 %s43, %s44
      %p46 = scmp.eq.s32.totalorder %s45, 0
      %s48 = sadd.s32 %s47, 1
      %s49 = scalar_select %p46, %s47, %s48
      %p52 = pneg %p46
      %p53 = scmp.eq.s32.totalorder %s16, 3
      %p54 = por %p52, %p53
      %p55 = scmp.ne.s32.totalorder %s47, %s50
      %p56 = scmp.eq.s32.totalorder %s16, 0
      %p57 = por %p55, %p56
      %p58 = scmp.ne.s32.totalorder %s47, %s50
      %p59 = scmp.eq.s32.totalorder %s21, 3
      %p60 = por %p58, %p59
      %p61 = scmp.ne.s32.totalorder %s50, %s51
      %p62 = scmp.eq.s32.totalorder %s21, 0
      %p63 = por %p61, %p62
      %p64 = scmp.ne.s32.totalorder %s50, %s51
      %p65 = scmp.eq.s32.totalorder %s22, 3
      %p66 = por %p64, %p65
      %p68 = scmp.ne.s32.totalorder %s51, %s67
      %p69 = scmp.eq.s32.totalorder %s22, 0
      %p70 = por %p68, %p69
      %s71 = ssub.s32 %s25, %s34
      %s72 = ssub.s32 %s24, %s38
      %s73 = sor.u32 %s71, %s72
      %p74 = scmp.eq.s32.totalorder %s73, 0
      %s76 = sadd.s32 %s75, 1
      %s77 = scalar_select %p74, %s75, %s76
      %p80 = pneg %p74
      %p81 = scmp.eq.s32.totalorder %s16, 3
      %p82 = por %p80, %p81
      %p83 = scmp.ne.s32.totalorder %s75, %s78
      %p84 = scmp.eq.s32.totalorder %s16, 0
      %p85 = por %p83, %p84
      %p86 = scmp.ne.s32.totalorder %s75, %s78
      %p87 = scmp.eq.s32.totalorder %s21, 3
      %p88 = por %p86, %p87
      %p89 = scmp.ne.s32.totalorder %s78, %s79
      %p90 = scmp.eq.s32.totalorder %s21, 0
      %p91 = por %p89, %p90
      %p92 = scmp.ne.s32.totalorder %s78, %s79
      %p93 = scmp.eq.s32.totalorder %s22, 3
      %p94 = por %p92, %p93
      %p96 = scmp.ne.s32.totalorder %s79, %s95
      %p97 = scmp.eq.s32.totalorder %s22, 0
      %p98 = por %p96, %p97
      %s99 = ssub.s32 %s24, %s38
      %p100 = scmp.eq.s32.totalorder %s99, 0
      %s102 = sadd.s32 %s101, 1
      %s103 = scalar_select %p100, %s101, %s102
      %p106 = pneg %p100
      %p107 = scmp.eq.s32.totalorder %s16, 3
      %p108 = por %p106, %p107
      %p109 = scmp.ne.s32.totalorder %s101, %s104
      %p110 = scmp.eq.s32.totalorder %s16, 0
      %p111 = por %p109, %p110
      %p112 = scmp.ne.s32.totalorder %s101, %s104
      %p113 = scmp.eq.s32.totalorder %s21, 3
      %p114 = por %p112, %p113
      %p115 = scmp.ne.s32.totalorder %s104, %s105
      %p116 = scmp.eq.s32.totalorder %s21, 0
      %p117 = por %p115, %p116
      %p118 = scmp.ne.s32.totalorder %s104, %s105
      %p119 = scmp.eq.s32.totalorder %s22, 3
      %p120 = por %p118, %p119
      %p122 = scmp.ne.s32.totalorder %s105, %s121
      %p123 = scmp.eq.s32.totalorder %s22, 0
      %p124 = por %p122, %p123
      %s125 = ssub.s32 %s23, %s42
      %s126 = ssub.s32 %s24, %s38
      %s127 = sor.u32 %s125, %s126
      %p128 = scmp.eq.s32.totalorder %s127, 0
      %s130 = sadd.s32 %s129, 1
      %s131 = scalar_select %p128, %s129, %s130
      %p134 = pneg %p128
      %p135 = scmp.eq.s32.totalorder %s16, 3
      %p136 = por %p134, %p135
      %p137 = scmp.ne.s32.totalorder %s129, %s132
      %p138 = scmp.eq.s32.totalorder %s16, 0
      %p139 = por %p137, %p138
      %p140 = scmp.ne.s32.totalorder %s129, %s132
      %p141 = scmp.eq.s32.totalorder %s21, 3
      %p142 = por %p140, %p141
      %p143 = scmp.ne.s32.totalorder %s132, %s133
      %p144 = scmp.eq.s32.totalorder %s21, 0
      %p145 = por %p143, %p144
      %p146 = scmp.ne.s32.totalorder %s132, %s133
      %p147 = scmp.eq.s32.totalorder %s22, 3
      %p148 = por %p146, %p147
      %p150 = scmp.ne.s32.totalorder %s133, %s149
      %p151 = scmp.eq.s32.totalorder %s22, 0
      %p152 = por %p150, %p151
      %p153 = scmp.le.s32.totalorder 1, %s16
      %p154 = scmp.lt.s32.totalorder %s16, 5
      %p155 = pnand %p153, %p154
      %p156 = pneg %p155
      // Predicated region
      $region9: #{tpu_custom_call.1} parent=5 // pred_check
        _
      $region10: #{tpu_custom_call.1} parent=5 // pred_check_branch
        %158 = sbr.rel (%p155) target = $region12
      $region11: #{tpu_custom_call.1} parent=5 // pred_region
        %s159 = ssub.s32 %s16, 1
        // Predicated region
        $region13: #{tpu_custom_call.1} parent=11 // pred_check
          %p160 = pneg %p91
        $region14: #{tpu_custom_call.1} parent=11 // pred_check_branch
          %162 = sbr.rel (%p160) target = $region16
        $region15: #{tpu_custom_call.1} parent=11 // pred_region
          %s163 = smul.u32 16, %s28
          %s165 = ssub.s32 1024, 1024
          %166 = vsyncadd [#allocation7], %s165
          %s167 = sadd.s32 %s27, %s163
          %s168 = smul.addr %s167, 64
          %s169 = scalar_lea.hbm %s1, %s168
          %s170 = sshll.u32 [#allocation6], 4
          %s171 = int_to_ptr.vmem [resolvable:$true] %s170
          %176 = dma.hbm_to_vmem [thread:$0]  %s169, 1024, %s171, [#allocation7], 64, 64, 4
        $region16: #{tpu_custom_call.1} parent=11 // pred_fallthru
          _
        // Predicated region
        $region17: #{tpu_custom_call.1} parent=11 // pred_check
          %p177 = pneg %p117
        $region18: #{tpu_custom_call.1} parent=11 // pred_check_branch
          %179 = sbr.rel (%p177) target = $region20
        $region19: #{tpu_custom_call.1} parent=11 // pred_region
          %p180 = scmp.lt.s32.totalorder %s27, 0
          %s181 = scalar_select %p180, %s27, 0
          %s182 = scalar_lea.vmem %s2, %s181
        $region20: #{tpu_custom_call.1} parent=11 // pred_fallthru
          _
      $region12: #{tpu_custom_call.1} parent=5 // pred_fallthru
        _
      %p183 = scmp.lt.s32.totalorder %s16, 4
      // Predicated region
      $region21: #{tpu_custom_call.1} parent=5 // pred_check
        %p184 = pneg %p183
      $region22: #{tpu_custom_call.1} parent=5 // pred_check_branch
        %186 = sbr.rel (%p184) target = $region24
      $region23: #{tpu_custom_call.1} parent=5 // pred_region
        // Predicated region
        $region25: #{tpu_custom_call.1} parent=23 // pred_check
          %p187 = pneg %p57
        $region26: #{tpu_custom_call.1} parent=23 // pred_check_branch
          %189 = sbr.rel (%p187) target = $region28
        $region27: #{tpu_custom_call.1} parent=23 // pred_region
          %s190 = sand.u32 %s47, 1
          %s191 = scalar_lea.sflag [#allocation4], %s190
          %s192 = sand.u32 %s47, 1
          %s193 = smul.addr %s192, 256
          %s194 = scalar_lea.vmem [#allocation3], %s193
          %s195 = smul.u32 64, %s23
          %s197 = ssub.s32 4096, 4096
          %198 = vsyncadd %s191, %s197
          %s199 = sadd.s32 %s25, %s195
          %s200 = smul.addr %s199, 64
          %s201 = scalar_lea.hbm %s0, %s200
          %s202 = sshll.u32 %s194, 4
          %s203 = int_to_ptr.vmem [resolvable:$true] %s202
          %208 = dma.hbm_to_vmem [thread:$0]  %s201, 4096, %s203, %s191, 64, 64, 4
        $region28: #{tpu_custom_call.1} parent=23 // pred_fallthru
          _
      $region24: #{tpu_custom_call.1} parent=5 // pred_fallthru
        _
      %p209 = scmp.le.s32.totalorder 1, %s16
      %p210 = scmp.lt.s32.totalorder %s16, 5
      %p211 = pnand %p209, %p210
      %p212 = pneg %p211
      // Predicated region
      $region29: #{tpu_custom_call.1} parent=5 // pred_check
        _
      $region30: #{tpu_custom_call.1} parent=5 // pred_check_branch
        %214 = sbr.rel (%p211) target = $region32
      $region31: #{tpu_custom_call.1} parent=5 // pred_region
        %s215 = ssub.s32 %s16, 1
        %s216 = sand.u32 %s50, 1
        %s217 = scalar_lea.sflag [#allocation4], %s216
        %s218 = sand.u32 %s50, 1
        %s219 = smul.addr %s218, 256
        %s220 = scalar_lea.vmem [#allocation3], %s219
        // Predicated region
        $region33: #{tpu_custom_call.1} parent=31 // pred_check
          %p221 = pneg %p63
        $region34: #{tpu_custom_call.1} parent=31 // pred_check_branch
          %223 = sbr.rel (%p221) target = $region36
        $region35: #{tpu_custom_call.1} parent=31 // pred_region
          %224 = dma.done %s217, 4096
        $region36: #{tpu_custom_call.1} parent=31 // pred_fallthru
          _
        // Predicated region
        $region37: #{tpu_custom_call.1} parent=31 // pred_check
          %p225 = pneg %p91
        $region38: #{tpu_custom_call.1} parent=31 // pred_check_branch
          %227 = sbr.rel (%p225) target = $region40
        $region39: #{tpu_custom_call.1} parent=31 // pred_region
          %228 = dma.done [#allocation7], 1024
        $region40: #{tpu_custom_call.1} parent=31 // pred_fallthru
          _
        %s229 = sand.u32 %s50, 1
        %s230 = scalar_lea.sflag [#allocation4], %s229
        %s231 = sand.u32 %s50, 1
        %s232 = smul.addr %s231, 256
        %s233 = scalar_lea.vmem [#allocation3], %s232
        %p234 = pneg %p63
        %p235 = pneg %p60
        %p236 = pneg %p91
        %p237 = pneg %p88
        %p238 = scmp.lt.s32.totalorder %s27, 0
        %s239 = scalar_select %p238, %s27, 0
        %s240 = scalar_lea.vmem %s2, %s239
        %p241 = pneg %p117
        %p242 = pneg %p114
        %p243 = pneg %p145
        %p244 = pneg %p142
        %s245 = sand.u32 %s132, 1
        %s246 = scalar_lea.sflag [#allocation5], %s245
        %s247 = sand.u32 %s132, 1
        %s248 = smul.addr %s247, 256
        %s249 = scalar_lea.vmem [#allocation8], %s248
        %s250 = smul.u32 64, %s26
        %s251 = smul.u32 16, %s28
        %p252 = scmp.lt.s32.totalorder %s27, 0
        %s253 = scalar_select %p252, %s27, 0
        %s254 = scalar_lea.vmem %s2, %s253
        %s255 = smul.u32 64, %s26
        %p257 = scmp.eq.s32.totalorder %s28, 0
        // Predicated region
        $region41: #{tpu_custom_call.1} parent=31 // pred_check
          %p258 = pneg %p257
        $region42: #{tpu_custom_call.1} parent=31 // pred_check_branch
          %260 = sbr.rel (%p258) target = $region44
        $region43: #{tpu_custom_call.1} parent=31 // pred_region
          %261 = vst [vmem:[#allocation2] sm:$0xff] 0.0
          %262 = vst [vmem:[#allocation2 + $0x8] sm:$0xff] 0.0
          %263 = vst [vmem:[#allocation2 + $0x10] sm:$0xff] 0.0
          %264 = vst [vmem:[#allocation2 + $0x18] sm:$0xff] 0.0
          %265 = vst [vmem:[#allocation2 + $0x20] sm:$0xff] 0.0
          %266 = vst [vmem:[#allocation2 + $0x28] sm:$0xff] 0.0
          %267 = vst [vmem:[#allocation2 + $0x30] sm:$0xff] 0.0
          %268 = vst [vmem:[#allocation2 + $0x38] sm:$0xff] 0.0
          %269 = vst [vmem:[#allocation2 + $0x40] sm:$0xff] 0.0
          %270 = vst [vmem:[#allocation2 + $0x48] sm:$0xff] 0.0
          %271 = vst [vmem:[#allocation2 + $0x50] sm:$0xff] 0.0
          %272 = vst [vmem:[#allocation2 + $0x58] sm:$0xff] 0.0
          %273 = vst [vmem:[#allocation2 + $0x60] sm:$0xff] 0.0
          %274 = vst [vmem:[#allocation2 + $0x68] sm:$0xff] 0.0
          %275 = vst [vmem:[#allocation2 + $0x70] sm:$0xff] 0.0
          %276 = vst [vmem:[#allocation2 + $0x78] sm:$0xff] 0.0
          %277 = vst [vmem:[#allocation2 + $0x80] sm:$0xff] 0.0
          %278 = vst [vmem:[#allocation2 + $0x88] sm:$0xff] 0.0
          %279 = vst [vmem:[#allocation2 + $0x90] sm:$0xff] 0.0
          %280 = vst [vmem:[#allocation2 + $0x98] sm:$0xff] 0.0
          %281 = vst [vmem:[#allocation2 + $0xa0] sm:$0xff] 0.0
          %282 = vst [vmem:[#allocation2 + $0xa8] sm:$0xff] 0.0
          %283 = vst [vmem:[#allocation2 + $0xb0] sm:$0xff] 0.0
          %284 = vst [vmem:[#allocation2 + $0xb8] sm:$0xff] 0.0
          %285 = vst [vmem:[#allocation2 + $0xc0] sm:$0xff] 0.0
          %286 = vst [vmem:[#allocation2 + $0xc8] sm:$0xff] 0.0
          %287 = vst [vmem:[#allocation2 + $0xd0] sm:$0xff] 0.0
          %288 = vst [vmem:[#allocation2 + $0xd8] sm:$0xff] 0.0
          %289 = vst [vmem:[#allocation2 + $0xe0] sm:$0xff] 0.0
          %290 = vst [vmem:[#allocation2 + $0xe8] sm:$0xff] 0.0
          %291 = vst [vmem:[#allocation2 + $0xf0] sm:$0xff] 0.0
          %292 = vst [vmem:[#allocation2 + $0xf8] sm:$0xff] 0.0
          %293 = vst [vmem:[#allocation2 + $0x100] sm:$0xff] 0.0
          %294 = vst [vmem:[#allocation2 + $0x108] sm:$0xff] 0.0
          %295 = vst [vmem:[#allocation2 + $0x110] sm:$0xff] 0.0
          %296 = vst [vmem:[#allocation2 + $0x118] sm:$0xff] 0.0
          %297 = vst [vmem:[#allocation2 + $0x120] sm:$0xff] 0.0
          %298 = vst [vmem:[#allocation2 + $0x128] sm:$0xff] 0.0
          %299 = vst [vmem:[#allocation2 + $0x130] sm:$0xff] 0.0
          %300 = vst [vmem:[#allocation2 + $0x138] sm:$0xff] 0.0
          %301 = vst [vmem:[#allocation2 + $0x140] sm:$0xff] 0.0
          %302 = vst [vmem:[#allocation2 + $0x148] sm:$0xff] 0.0
          %303 = vst [vmem:[#allocation2 + $0x150] sm:$0xff] 0.0
          %304 = vst [vmem:[#allocation2 + $0x158] sm:$0xff] 0.0
          %305 = vst [vmem:[#allocation2 + $0x160] sm:$0xff] 0.0
          %306 = vst [vmem:[#allocation2 + $0x168] sm:$0xff] 0.0
          %307 = vst [vmem:[#allocation2 + $0x170] sm:$0xff] 0.0
          %308 = vst [vmem:[#allocation2 + $0x178] sm:$0xff] 0.0
          %309 = vst [vmem:[#allocation2 + $0x180] sm:$0xff] 0.0
          %310 = vst [vmem:[#allocation2 + $0x188] sm:$0xff] 0.0
          %311 = vst [vmem:[#allocation2 + $0x190] sm:$0xff] 0.0
          %312 = vst [vmem:[#allocation2 + $0x198] sm:$0xff] 0.0
          %313 = vst [vmem:[#allocation2 + $0x1a0] sm:$0xff] 0.0
          %314 = vst [vmem:[#allocation2 + $0x1a8] sm:$0xff] 0.0
          %315 = vst [vmem:[#allocation2 + $0x1b0] sm:$0xff] 0.0
          %316 = vst [vmem:[#allocation2 + $0x1b8] sm:$0xff] 0.0
          %317 = vst [vmem:[#allocation2 + $0x1c0] sm:$0xff] 0.0
          %318 = vst [vmem:[#allocation2 + $0x1c8] sm:$0xff] 0.0
          %319 = vst [vmem:[#allocation2 + $0x1d0] sm:$0xff] 0.0
          %320 = vst [vmem:[#allocation2 + $0x1d8] sm:$0xff] 0.0
          %321 = vst [vmem:[#allocation2 + $0x1e0] sm:$0xff] 0.0
          %322 = vst [vmem:[#allocation2 + $0x1e8] sm:$0xff] 0.0
          %323 = vst [vmem:[#allocation2 + $0x1f0] sm:$0xff] 0.0
          %324 = vst [vmem:[#allocation2 + $0x1f8] sm:$0xff] 0.0
        $region44: #{tpu_custom_call.1} parent=31 // pred_fallthru
          _
        %v325 = vld [vmem:[#allocation2] sm:$0xff]
        %v326 = vld [vmem:[#allocation2 + $0x8] sm:$0xff]
        %v327 = vld [vmem:[#allocation2 + $0x10] sm:$0xff]
        %v328 = vld [vmem:[#allocation2 + $0x18] sm:$0xff]
        %v329 = vld [vmem:[#allocation2 + $0x20] sm:$0xff]
        %v330 = vld [vmem:[#allocation2 + $0x28] sm:$0xff]
        %v331 = vld [vmem:[#allocation2 + $0x30] sm:$0xff]
        %v332 = vld [vmem:[#allocation2 + $0x38] sm:$0xff]
        %v333 = vld [vmem:[#allocation2 + $0x40] sm:$0xff]
        %v334 = vld [vmem:[#allocation2 + $0x48] sm:$0xff]
        %v335 = vld [vmem:[#allocation2 + $0x50] sm:$0xff]
        %v336 = vld [vmem:[#allocation2 + $0x58] sm:$0xff]
        %v337 = vld [vmem:[#allocation2 + $0x60] sm:$0xff]
        %v338 = vld [vmem:[#allocation2 + $0x68] sm:$0xff]
        %v339 = vld [vmem:[#allocation2 + $0x70] sm:$0xff]
        %v340 = vld [vmem:[#allocation2 + $0x78] sm:$0xff]
        %v341 = vld [vmem:[#allocation2 + $0x80] sm:$0xff]
        %v342 = vld [vmem:[#allocation2 + $0x88] sm:$0xff]
        %v343 = vld [vmem:[#allocation2 + $0x90] sm:$0xff]
        %v344 = vld [vmem:[#allocation2 + $0x98] sm:$0xff]
        %v345 = vld [vmem:[#allocation2 + $0xa0] sm:$0xff]
        %v346 = vld [vmem:[#allocation2 + $0xa8] sm:$0xff]
        %v347 = vld [vmem:[#allocation2 + $0xb0] sm:$0xff]
        %v348 = vld [vmem:[#allocation2 + $0xb8] sm:$0xff]
        %v349 = vld [vmem:[#allocation2 + $0xc0] sm:$0xff]
        %v350 = vld [vmem:[#allocation2 + $0xc8] sm:$0xff]
        %v351 = vld [vmem:[#allocation2 + $0xd0] sm:$0xff]
        %v352 = vld [vmem:[#allocation2 + $0xd8] sm:$0xff]
        %v353 = vld [vmem:[#allocation2 + $0xe0] sm:$0xff]
        %v354 = vld [vmem:[#allocation2 + $0xe8] sm:$0xff]
        %v355 = vld [vmem:[#allocation2 + $0xf0] sm:$0xff]
        %v356 = vld [vmem:[#allocation2 + $0xf8] sm:$0xff]
        %v357 = vld [vmem:[#allocation2 + $0x100] sm:$0xff]
        %v358 = vld [vmem:[#allocation2 + $0x108] sm:$0xff]
        %v359 = vld [vmem:[#allocation2 + $0x110] sm:$0xff]
        %v360 = vld [vmem:[#allocation2 + $0x118] sm:$0xff]
        %v361 = vld [vmem:[#allocation2 + $0x120] sm:$0xff]
        %v362 = vld [vmem:[#allocation2 + $0x128] sm:$0xff]
        %v363 = vld [vmem:[#allocation2 + $0x130] sm:$0xff]
        %v364 = vld [vmem:[#allocation2 + $0x138] sm:$0xff]
        %v365 = vld [vmem:[#allocation2 + $0x140] sm:$0xff]
        %v366 = vld [vmem:[#allocation2 + $0x148] sm:$0xff]
        %v367 = vld [vmem:[#allocation2 + $0x150] sm:$0xff]
        %v368 = vld [vmem:[#allocation2 + $0x158] sm:$0xff]
        %v369 = vld [vmem:[#allocation2 + $0x160] sm:$0xff]
        %v370 = vld [vmem:[#allocation2 + $0x168] sm:$0xff]
        %v371 = vld [vmem:[#allocation2 + $0x170] sm:$0xff]
        %v372 = vld [vmem:[#allocation2 + $0x178] sm:$0xff]
        %v373 = vld [vmem:[#allocation2 + $0x180] sm:$0xff]
        %v374 = vld [vmem:[#allocation2 + $0x188] sm:$0xff]
        %v375 = vld [vmem:[#allocation2 + $0x190] sm:$0xff]
        %v376 = vld [vmem:[#allocation2 + $0x198] sm:$0xff]
        %v377 = vld [vmem:[#allocation2 + $0x1a0] sm:$0xff]
        %v378 = vld [vmem:[#allocation2 + $0x1a8] sm:$0xff]
        %v379 = vld [vmem:[#allocation2 + $0x1b0] sm:$0xff]
        %v380 = vld [vmem:[#allocation2 + $0x1b8] sm:$0xff]
        %v381 = vld [vmem:[#allocation2 + $0x1c0] sm:$0xff]
        %v382 = vld [vmem:[#allocation2 + $0x1c8] sm:$0xff]
        %v383 = vld [vmem:[#allocation2 + $0x1d0] sm:$0xff]
        %v384 = vld [vmem:[#allocation2 + $0x1d8] sm:$0xff]
        %v385 = vld [vmem:[#allocation2 + $0x1e0] sm:$0xff]
        %v386 = vld [vmem:[#allocation2 + $0x1e8] sm:$0xff]
        %v387 = vld [vmem:[#allocation2 + $0x1f0] sm:$0xff]
        %v388 = vld [vmem:[#allocation2 + $0x1f8] sm:$0xff]
        %v389 = vld [vmem:[%s220] sm:$0xf]
        %v390 = vld [vmem:[%s220 + $0x4] sm:$0xf]
        %v391 = vld [vmem:[%s220 + $0x8] sm:$0xf]
        %v392 = vld [vmem:[%s220 + $0xc] sm:$0xf]
        %v393 = vld [vmem:[%s220 + $0x10] sm:$0xf]
        %v394 = vld [vmem:[%s220 + $0x14] sm:$0xf]
        %v395 = vld [vmem:[%s220 + $0x18] sm:$0xf]
        %v396 = vld [vmem:[%s220 + $0x1c] sm:$0xf]
        %v397 = vld [vmem:[%s220 + $0x20] sm:$0xf]
        %v398 = vld [vmem:[%s220 + $0x24] sm:$0xf]
        %v399 = vld [vmem:[%s220 + $0x28] sm:$0xf]
        %v400 = vld [vmem:[%s220 + $0x2c] sm:$0xf]
        %v401 = vld [vmem:[%s220 + $0x30] sm:$0xf]
        %v402 = vld [vmem:[%s220 + $0x34] sm:$0xf]
        %v403 = vld [vmem:[%s220 + $0x38] sm:$0xf]
        %v404 = vld [vmem:[%s220 + $0x3c] sm:$0xf]
        %v405 = vld [vmem:[%s220 + $0x40] sm:$0xf]
        %v406 = vld [vmem:[%s220 + $0x44] sm:$0xf]
        %v407 = vld [vmem:[%s220 + $0x48] sm:$0xf]
        %v408 = vld [vmem:[%s220 + $0x4c] sm:$0xf]
        %v409 = vld [vmem:[%s220 + $0x50] sm:$0xf]
        %v410 = vld [vmem:[%s220 + $0x54] sm:$0xf]
        %v411 = vld [vmem:[%s220 + $0x58] sm:$0xf]
        %v412 = vld [vmem:[%s220 + $0x5c] sm:$0xf]
        %v413 = vld [vmem:[%s220 + $0x60] sm:$0xf]
        %v414 = vld [vmem:[%s220 + $0x64] sm:$0xf]
        %v415 = vld [vmem:[%s220 + $0x68] sm:$0xf]
        %v416 = vld [vmem:[%s220 + $0x6c] sm:$0xf]
        %v417 = vld [vmem:[%s220 + $0x70] sm:$0xf]
        %v418 = vld [vmem:[%s220 + $0x74] sm:$0xf]
        %v419 = vld [vmem:[%s220 + $0x78] sm:$0xf]
        %v420 = vld [vmem:[%s220 + $0x7c] sm:$0xf]
        %v421 = vld [vmem:[%s220 + $0x80] sm:$0xf]
        %v422 = vld [vmem:[%s220 + $0x84] sm:$0xf]
        %v423 = vld [vmem:[%s220 + $0x88] sm:$0xf]
        %v424 = vld [vmem:[%s220 + $0x8c] sm:$0xf]
        %v425 = vld [vmem:[%s220 + $0x90] sm:$0xf]
        %v426 = vld [vmem:[%s220 + $0x94] sm:$0xf]
        %v427 = vld [vmem:[%s220 + $0x98] sm:$0xf]
        %v428 = vld [vmem:[%s220 + $0x9c] sm:$0xf]
        %v429 = vld [vmem:[%s220 + $0xa0] sm:$0xf]
        %v430 = vld [vmem:[%s220 + $0xa4] sm:$0xf]
        %v431 = vld [vmem:[%s220 + $0xa8] sm:$0xf]
        %v432 = vld [vmem:[%s220 + $0xac] sm:$0xf]
        %v433 = vld [vmem:[%s220 + $0xb0] sm:$0xf]
        %v434 = vld [vmem:[%s220 + $0xb4] sm:$0xf]
        %v435 = vld [vmem:[%s220 + $0xb8] sm:$0xf]
        %v436 = vld [vmem:[%s220 + $0xbc] sm:$0xf]
        %v437 = vld [vmem:[%s220 + $0xc0] sm:$0xf]
        %v438 = vld [vmem:[%s220 + $0xc4] sm:$0xf]
        %v439 = vld [vmem:[%s220 + $0xc8] sm:$0xf]
        %v440 = vld [vmem:[%s220 + $0xcc] sm:$0xf]
        %v441 = vld [vmem:[%s220 + $0xd0] sm:$0xf]
        %v442 = vld [vmem:[%s220 + $0xd4] sm:$0xf]
        %v443 = vld [vmem:[%s220 + $0xd8] sm:$0xf]
        %v444 = vld [vmem:[%s220 + $0xdc] sm:$0xf]
        %v445 = vld [vmem:[%s220 + $0xe0] sm:$0xf]
        %v446 = vld [vmem:[%s220 + $0xe4] sm:$0xf]
        %v447 = vld [vmem:[%s220 + $0xe8] sm:$0xf]
        %v448 = vld [vmem:[%s220 + $0xec] sm:$0xf]
        %v449 = vld [vmem:[%s220 + $0xf0] sm:$0xf]
        %v450 = vld [vmem:[%s220 + $0xf4] sm:$0xf]
        %v451 = vld [vmem:[%s220 + $0xf8] sm:$0xf]
        %v452 = vld [vmem:[%s220 + $0xfc] sm:$0xf]
        %v453 = vld [vmem:[#allocation6] sm:$0xf]
        %v454 = vld [vmem:[#allocation6 + $0x4] sm:$0xf]
        %v455 = vld [vmem:[#allocation6 + $0x8] sm:$0xf]
        %v456 = vld [vmem:[#allocation6 + $0xc] sm:$0xf]
        %v457 = vld [vmem:[#allocation6 + $0x10] sm:$0xf]
        %v458 = vld [vmem:[#allocation6 + $0x14] sm:$0xf]
        %v459 = vld [vmem:[#allocation6 + $0x18] sm:$0xf]
        %v460 = vld [vmem:[#allocation6 + $0x1c] sm:$0xf]
        %v461 = vld [vmem:[#allocation6 + $0x20] sm:$0xf]
        %v462 = vld [vmem:[#allocation6 + $0x24] sm:$0xf]
        %v463 = vld [vmem:[#allocation6 + $0x28] sm:$0xf]
        %v464 = vld [vmem:[#allocation6 + $0x2c] sm:$0xf]
        %v465 = vld [vmem:[#allocation6 + $0x30] sm:$0xf]
        %v466 = vld [vmem:[#allocation6 + $0x34] sm:$0xf]
        %v467 = vld [vmem:[#allocation6 + $0x38] sm:$0xf]
        %v468 = vld [vmem:[#allocation6 + $0x3c] sm:$0xf]
        %v533 = vunpack.c.l.b16 %v389
        %v534 = vunpack.c.l.b16 %v390
        %v535 = vunpack.c.l.b16 %v391
        %v536 = vunpack.c.l.b16 %v392
        %v537 = vunpack.c.l.b16 %v393
        %v538 = vunpack.c.l.b16 %v394
        %v539 = vunpack.c.l.b16 %v395
        %v540 = vunpack.c.l.b16 %v396
        %v541 = vunpack.c.l.b16 %v397
        %v542 = vunpack.c.l.b16 %v398
        %v543 = vunpack.c.l.b16 %v399
        %v544 = vunpack.c.l.b16 %v400
        %v545 = vunpack.c.l.b16 %v401
        %v546 = vunpack.c.l.b16 %v402
        %v547 = vunpack.c.l.b16 %v403
        %v548 = vunpack.c.l.b16 %v404
        %v549 = vunpack.c.l.b16 %v405
        %v550 = vunpack.c.l.b16 %v406
        %v551 = vunpack.c.l.b16 %v407
        %v552 = vunpack.c.l.b16 %v408
        %v553 = vunpack.c.l.b16 %v409
        %v554 = vunpack.c.l.b16 %v410
        %v555 = vunpack.c.l.b16 %v411
        %v556 = vunpack.c.l.b16 %v412
        %v557 = vunpack.c.l.b16 %v413
        %v558 = vunpack.c.l.b16 %v414
        %v559 = vunpack.c.l.b16 %v415
        %v560 = vunpack.c.l.b16 %v416
        %v561 = vunpack.c.l.b16 %v417
        %v562 = vunpack.c.l.b16 %v418
        %v563 = vunpack.c.l.b16 %v419
        %v564 = vunpack.c.l.b16 %v420
        %v565 = vunpack.c.l.b16 %v421
        %v566 = vunpack.c.l.b16 %v422
        %v567 = vunpack.c.l.b16 %v423
        %v568 = vunpack.c.l.b16 %v424
        %v569 = vunpack.c.l.b16 %v425
        %v570 = vunpack.c.l.b16 %v426
        %v571 = vunpack.c.l.b16 %v427
        %v572 = vunpack.c.l.b16 %v428
        %v573 = vunpack.c.l.b16 %v429
        %v574 = vunpack.c.l.b16 %v430
        %v575 = vunpack.c.l.b16 %v431
        %v576 = vunpack.c.l.b16 %v432
        %v577 = vunpack.c.l.b16 %v433
        %v578 = vunpack.c.l.b16 %v434
        %v579 = vunpack.c.l.b16 %v435
        %v580 = vunpack.c.l.b16 %v436
        %v581 = vunpack.c.l.b16 %v437
        %v582 = vunpack.c.l.b16 %v438
        %v583 = vunpack.c.l.b16 %v439
        %v584 = vunpack.c.l.b16 %v440
        %v585 = vunpack.c.l.b16 %v441
        %v586 = vunpack.c.l.b16 %v442
        %v587 = vunpack.c.l.b16 %v443
        %v588 = vunpack.c.l.b16 %v444
        %v589 = vunpack.c.l.b16 %v445
        %v590 = vunpack.c.l.b16 %v446
        %v591 = vunpack.c.l.b16 %v447
        %v592 = vunpack.c.l.b16 %v448
        %v593 = vunpack.c.l.b16 %v449
        %v594 = vunpack.c.l.b16 %v450
        %v595 = vunpack.c.l.b16 %v451
        %v596 = vunpack.c.l.b16 %v452
        %v597 = vpack.c.b16 %v534, %v533
        %v598 = vpack.c.b16 %v536, %v535
        %v599 = vpack.c.b16 %v538, %v537
        %v600 = vpack.c.b16 %v540, %v539
        %v601 = vpack.c.b16 %v542, %v541
        %v602 = vpack.c.b16 %v544, %v543
        %v603 = vpack.c.b16 %v546, %v545
        %v604 = vpack.c.b16 %v548, %v547
        %v605 = vpack.c.b16 %v550, %v549
        %v606 = vpack.c.b16 %v552, %v551
        %v607 = vpack.c.b16 %v554, %v553
        %v608 = vpack.c.b16 %v556, %v555
        %v609 = vpack.c.b16 %v558, %v557
        %v610 = vpack.c.b16 %v560, %v559
        %v611 = vpack.c.b16 %v562, %v561
        %v612 = vpack.c.b16 %v564, %v563
        %v613 = vpack.c.b16 %v566, %v565
        %v614 = vpack.c.b16 %v568, %v567
        %v615 = vpack.c.b16 %v570, %v569
        %v616 = vpack.c.b16 %v572, %v571
        %v617 = vpack.c.b16 %v574, %v573
        %v618 = vpack.c.b16 %v576, %v575
        %v619 = vpack.c.b16 %v578, %v577
        %v620 = vpack.c.b16 %v580, %v579
        %v621 = vpack.c.b16 %v582, %v581
        %v622 = vpack.c.b16 %v584, %v583
        %v623 = vpack.c.b16 %v586, %v585
        %v624 = vpack.c.b16 %v588, %v587
        %v625 = vpack.c.b16 %v590, %v589
        %v626 = vpack.c.b16 %v592, %v591
        %v627 = vpack.c.b16 %v594, %v593
        %v628 = vpack.c.b16 %v596, %v595
        %v677 = vunpack.c.l.b16 %v453
        %v678 = vunpack.c.l.b16 %v454
        %v679 = vunpack.c.l.b16 %v455
        %v680 = vunpack.c.l.b16 %v456
        %v681 = vunpack.c.l.b16 %v457
        %v682 = vunpack.c.l.b16 %v458
        %v683 = vunpack.c.l.b16 %v459
        %v684 = vunpack.c.l.b16 %v460
        %v685 = vunpack.c.l.b16 %v461
        %v686 = vunpack.c.l.b16 %v462
        %v687 = vunpack.c.l.b16 %v463
        %v688 = vunpack.c.l.b16 %v464
        %v689 = vunpack.c.l.b16 %v465
        %v690 = vunpack.c.l.b16 %v466
        %v691 = vunpack.c.l.b16 %v467
        %v692 = vunpack.c.l.b16 %v468
        %v693 = vpack.c.b16 %v678, %v677
        %v694 = vpack.c.b16 %v680, %v679
        %v695 = vpack.c.b16 %v682, %v681
        %v696 = vpack.c.b16 %v684, %v683
        %v697 = vpack.c.b16 %v686, %v685
        %v698 = vpack.c.b16 %v688, %v687
        %v699 = vpack.c.b16 %v690, %v689
        %v700 = vpack.c.b16 %v692, %v691
        %709 = vmatprep.subr.bf16.mxu0 0
        %710 = vmatpush1.bf16.msra.mxu0 %v693
        %711 = vmatprep.subr.bf16.mxu0 0
        %712 = vmatpush1.bf16.msra.mxu0 %v694
        %713 = vmatprep.subr.bf16.mxu0 0
        %714 = vmatpush1.bf16.msra.mxu0 %v695
        %715 = vmatprep.subr.bf16.mxu0 0
        %716 = vmatpush1.bf16.msra.mxu0 %v696
        %717 = vmatprep.subr.bf16.mxu0 0
        %718 = vmatpush1.bf16.msra.mxu0 %v697
        %719 = vmatprep.subr.bf16.mxu0 0
        %720 = vmatpush1.bf16.msra.mxu0 %v698
        %721 = vmatprep.subr.bf16.mxu0 0
        %722 = vmatpush1.bf16.msra.mxu0 %v699
        %723 = vmatprep.subr.bf16.mxu0 0
        %724 = vmatpush1.bf16.msra.mxu0 %v700
        %725 = vmatprep.subr.bf16.mxu0 0
        %726 = vmatpush1.bf16.msra.mxu0 0
        %727 = vmatprep.subr.bf16.mxu0 0
        %728 = vmatpush1.bf16.msra.mxu0 0
        %729 = vmatprep.subr.bf16.mxu0 0
        %730 = vmatpush1.bf16.msra.mxu0 0
        %731 = vmatprep.subr.bf16.mxu0 0
        %732 = vmatpush1.bf16.msra.mxu0 0
        %733 = vmatprep.subr.bf16.mxu0 0
        %734 = vmatpush1.bf16.msra.mxu0 0
        %735 = vmatprep.subr.bf16.mxu0 0
        %736 = vmatpush1.bf16.msra.mxu0 0
        %737 = vmatprep.subr.bf16.mxu0 0
        %738 = vmatpush1.bf16.msra.mxu0 0
        %739 = vmatprep.subr.bf16.mxu0 0
        %740 = vmatpush1.bf16.msra.mxu0 0
        %741 = vmatprep.mubr.bf16.mxu0 0
        %742 = vmatmul.mubr.bf16.gmra.mrb[0].mxu0 %v597
        %v743 = vpop.f32.mrb[0].mxu0
        %v744 = vadd.f32 0.0, %v743
        %v745 = vpop.f32.mrb[0].mxu0
        %v746 = vpop.f32.mrb[0].mxu0
        %v747 = vadd.f32 0.0, %v746
        %v748 = vpop.f32.mrb[0].mxu0
        %749 = vmatprep.mubr.bf16.mxu0 0
        %750 = vmatmul.mubr.bf16.gmra.mrb[0].mxu0 %v598
        %v751 = vpop.f32.mrb[0].mxu0
        %v752 = vadd.f32 0.0, %v751
        %v753 = vpop.f32.mrb[0].mxu0
        %v754 = vpop.f32.mrb[0].mxu0
        %v755 = vadd.f32 0.0, %v754
        %v756 = vpop.f32.mrb[0].mxu0
        %757 = vmatprep.mubr.bf16.mxu0 0
        %758 = vmatmul.mubr.bf16.gmra.mrb[0].mxu0 %v599
        %v759 = vpop.f32.mrb[0].mxu0
        %v760 = vadd.f32 0.0, %v759
        %v761 = vpop.f32.mrb[0].mxu0
        %v762 = vpop.f32.mrb[0].mxu0
        %v763 = vadd.f32 0.0, %v762
        %v764 = vpop.f32.mrb[0].mxu0
        %765 = vmatprep.mubr.bf16.mxu0 0
        %766 = vmatmul.mubr.bf16.gmra.mrb[0].mxu0 %v600
        %v767 = vpop.f32.mrb[0].mxu0
        %v768 = vadd.f32 0.0, %v767
        %v769 = vpop.f32.mrb[0].mxu0
        %v770 = vpop.f32.mrb[0].mxu0
        %v771 = vadd.f32 0.0, %v770
        %v772 = vpop.f32.mrb[0].mxu0
        %773 = vmatprep.mubr.bf16.mxu0 0
        %774 = vmatmul.mubr.bf16.gmra.mrb[0].mxu0 %v601
        %v775 = vpop.f32.mrb[0].mxu0
        %v776 = vadd.f32 0.0, %v775
        %v777 = vpop.f32.mrb[0].mxu0
        %v778 = vpop.f32.mrb[0].mxu0
        %v779 = vadd.f32 0.0, %v778
        %v780 = vpop.f32.mrb[0].mxu0
        %781 = vmatprep.mubr.bf16.mxu0 0
        %782 = vmatmul.mubr.bf16.gmra.mrb[0].mxu0 %v602
        %v783 = vpop.f32.mrb[0].mxu0
        %v784 = vadd.f32 0.0, %v783
        %v785 = vpop.f32.mrb[0].mxu0
        %v786 = vpop.f32.mrb[0].mxu0
        %v787 = vadd.f32 0.0, %v786
        %v788 = vpop.f32.mrb[0].mxu0
        %789 = vmatprep.mubr.bf16.mxu0 0
        %790 = vmatmul.mubr.bf16.gmra.mrb[0].mxu0 %v603
        %v791 = vpop.f32.mrb[0].mxu0
        %v792 = vadd.f32 0.0, %v791
        %v793 = vpop.f32.mrb[0].mxu0
        %v794 = vpop.f32.mrb[0].mxu0
        %v795 = vadd.f32 0.0, %v794
        %v796 = vpop.f32.mrb[0].mxu0
        %797 = vmatprep.mubr.bf16.mxu0 0
        %798 = vmatmul.mubr.bf16.gmra.mrb[0].mxu0 %v604
        %v799 = vpop.f32.mrb[0].mxu0
        %v800 = vadd.f32 0.0, %v799
        %v801 = vpop.f32.mrb[0].mxu0
        %v802 = vpop.f32.mrb[0].mxu0
        %v803 = vadd.f32 0.0, %v802
        %v804 = vpop.f32.mrb[0].mxu0
        %805 = vmatprep.mubr.bf16.mxu0 0
        %806 = vmatmul.mubr.bf16.gmra.mrb[0].mxu0 %v605
        %v807 = vpop.f32.mrb[0].mxu0
        %v808 = vadd.f32 0.0, %v807
        %v809 = vpop.f32.mrb[0].mxu0
        %v810 = vpop.f32.mrb[0].mxu0
        %v811 = vadd.f32 0.0, %v810
        %v812 = vpop.f32.mrb[0].mxu0
        %813 = vmatprep.mubr.bf16.mxu0 0
        %814 = vmatmul.mubr.bf16.gmra.mrb[0].mxu0 %v606
        %v815 = vpop.f32.mrb[0].mxu0
        %v816 = vadd.f32 0.0, %v815
        %v817 = vpop.f32.mrb[0].mxu0
        %v818 = vpop.f32.mrb[0].mxu0
        %v819 = vadd.f32 0.0, %v818
        %v820 = vpop.f32.mrb[0].mxu0
        %821 = vmatprep.mubr.bf16.mxu0 0
        %822 = vmatmul.mubr.bf16.gmra.mrb[0].mxu0 %v607
        %v823 = vpop.f32.mrb[0].mxu0
        %v824 = vadd.f32 0.0, %v823
        %v825 = vpop.f32.mrb[0].mxu0
        %v826 = vpop.f32.mrb[0].mxu0
        %v827 = vadd.f32 0.0, %v826
        %v828 = vpop.f32.mrb[0].mxu0
        %829 = vmatprep.mubr.bf16.mxu0 0
        %830 = vmatmul.mubr.bf16.gmra.mrb[0].mxu0 %v608
        %v831 = vpop.f32.mrb[0].mxu0
        %v832 = vadd.f32 0.0, %v831
        %v833 = vpop.f32.mrb[0].mxu0
        %v834 = vpop.f32.mrb[0].mxu0
        %v835 = vadd.f32 0.0, %v834
        %v836 = vpop.f32.mrb[0].mxu0
        %837 = vmatprep.mubr.bf16.mxu0 0
        %838 = vmatmul.mubr.bf16.gmra.mrb[0].mxu0 %v609
        %v839 = vpop.f32.mrb[0].mxu0
        %v840 = vadd.f32 0.0, %v839
        %v841 = vpop.f32.mrb[0].mxu0
        %v842 = vpop.f32.mrb[0].mxu0
        %v843 = vadd.f32 0.0, %v842
        %v844 = vpop.f32.mrb[0].mxu0
        %845 = vmatprep.mubr.bf16.mxu0 0
        %846 = vmatmul.mubr.bf16.gmra.mrb[0].mxu0 %v610
        %v847 = vpop.f32.mrb[0].mxu0
        %v848 = vadd.f32 0.0, %v847
        %v849 = vpop.f32.mrb[0].mxu0
        %v850 = vpop.f32.mrb[0].mxu0
        %v851 = vadd.f32 0.0, %v850
        %v852 = vpop.f32.mrb[0].mxu0
        %853 = vmatprep.mubr.bf16.mxu0 0
        %854 = vmatmul.mubr.bf16.gmra.mrb[0].mxu0 %v611
        %v855 = vpop.f32.mrb[0].mxu0
        %v856 = vadd.f32 0.0, %v855
        %v857 = vpop.f32.mrb[0].mxu0
        %v858 = vpop.f32.mrb[0].mxu0
        %v859 = vadd.f32 0.0, %v858
        %v860 = vpop.f32.mrb[0].mxu0
        %861 = vmatprep.mubr.bf16.mxu0 0
        %862 = vmatmul.mubr.bf16.gmra.mrb[0].mxu0 %v612
        %v863 = vpop.f32.mrb[0].mxu0
        %v864 = vadd.f32 0.0, %v863
        %v865 = vpop.f32.mrb[0].mxu0
        %v866 = vpop.f32.mrb[0].mxu0
        %v867 = vadd.f32 0.0, %v866
        %v868 = vpop.f32.mrb[0].mxu0
        %869 = vmatprep.mubr.bf16.mxu0 0
        %870 = vmatmul.mubr.bf16.gmra.mrb[0].mxu0 %v613
        %v871 = vpop.f32.mrb[0].mxu0
        %v872 = vadd.f32 0.0, %v871
        %v873 = vpop.f32.mrb[0].mxu0
        %v874 = vpop.f32.mrb[0].mxu0
        %v875 = vadd.f32 0.0, %v874
        %v876 = vpop.f32.mrb[0].mxu0
        %877 = vmatprep.mubr.bf16.mxu0 0
        %878 = vmatmul.mubr.bf16.gmra.mrb[0].mxu0 %v614
        %v879 = vpop.f32.mrb[0].mxu0
        %v880 = vadd.f32 0.0, %v879
        %v881 = vpop.f32.mrb[0].mxu0
        %v882 = vpop.f32.mrb[0].mxu0
        %v883 = vadd.f32 0.0, %v882
        %v884 = vpop.f32.mrb[0].mxu0
        %885 = vmatprep.mubr.bf16.mxu0 0
        %886 = vmatmul.mubr.bf16.gmra.mrb[0].mxu0 %v615
        %v887 = vpop.f32.mrb[0].mxu0
        %v888 = vadd.f32 0.0, %v887
        %v889 = vpop.f32.mrb[0].mxu0
        %v890 = vpop.f32.mrb[0].mxu0
        %v891 = vadd.f32 0.0, %v890
        %v892 = vpop.f32.mrb[0].mxu0
        %893 = vmatprep.mubr.bf16.mxu0 0
        %894 = vmatmul.mubr.bf16.gmra.mrb[0].mxu0 %v616
        %v895 = vpop.f32.mrb[0].mxu0
        %v896 = vadd.f32 0.0, %v895
        %v897 = vpop.f32.mrb[0].mxu0
        %v898 = vpop.f32.mrb[0].mxu0
        %v899 = vadd.f32 0.0, %v898
        %v900 = vpop.f32.mrb[0].mxu0
        %901 = vmatprep.mubr.bf16.mxu0 0
        %902 = vmatmul.mubr.bf16.gmra.mrb[0].mxu0 %v617
        %v903 = vpop.f32.mrb[0].mxu0
        %v904 = vadd.f32 0.0, %v903
        %v905 = vpop.f32.mrb[0].mxu0
        %v906 = vpop.f32.mrb[0].mxu0
        %v907 = vadd.f32 0.0, %v906
        %v908 = vpop.f32.mrb[0].mxu0
        %909 = vmatprep.mubr.bf16.mxu0 0
        %910 = vmatmul.mubr.bf16.gmra.mrb[0].mxu0 %v618
        %v911 = vpop.f32.mrb[0].mxu0
        %v912 = vadd.f32 0.0, %v911
        %v913 = vpop.f32.mrb[0].mxu0
        %v914 = vpop.f32.mrb[0].mxu0
        %v915 = vadd.f32 0.0, %v914
        %v916 = vpop.f32.mrb[0].mxu0
        %917 = vmatprep.mubr.bf16.mxu0 0
        %918 = vmatmul.mubr.bf16.gmra.mrb[0].mxu0 %v619
        %v919 = vpop.f32.mrb[0].mxu0
        %v920 = vadd.f32 0.0, %v919
        %v921 = vpop.f32.mrb[0].mxu0
        %v922 = vpop.f32.mrb[0].mxu0
        %v923 = vadd.f32 0.0, %v922
        %v924 = vpop.f32.mrb[0].mxu0
        %925 = vmatprep.mubr.bf16.mxu0 0
        %926 = vmatmul.mubr.bf16.gmra.mrb[0].mxu0 %v620
        %v927 = vpop.f32.mrb[0].mxu0
        %v928 = vadd.f32 0.0, %v927
        %v929 = vpop.f32.mrb[0].mxu0
        %v930 = vpop.f32.mrb[0].mxu0
        %v931 = vadd.f32 0.0, %v930
        %v932 = vpop.f32.mrb[0].mxu0
        %933 = vmatprep.mubr.bf16.mxu0 0
        %934 = vmatmul.mubr.bf16.gmra.mrb[0].mxu0 %v621
        %v935 = vpop.f32.mrb[0].mxu0
        %v936 = vadd.f32 0.0, %v935
        %v937 = vpop.f32.mrb[0].mxu0
        %v938 = vpop.f32.mrb[0].mxu0
        %v939 = vadd.f32 0.0, %v938
        %v940 = vpop.f32.mrb[0].mxu0
        %941 = vmatprep.mubr.bf16.mxu0 0
        %942 = vmatmul.mubr.bf16.gmra.mrb[0].mxu0 %v622
        %v943 = vpop.f32.mrb[0].mxu0
        %v944 = vadd.f32 0.0, %v943
        %v945 = vpop.f32.mrb[0].mxu0
        %v946 = vpop.f32.mrb[0].mxu0
        %v947 = vadd.f32 0.0, %v946
        %v948 = vpop.f32.mrb[0].mxu0
        %949 = vmatprep.mubr.bf16.mxu0 0
        %950 = vmatmul.mubr.bf16.gmra.mrb[0].mxu0 %v623
        %v951 = vpop.f32.mrb[0].mxu0
        %v952 = vadd.f32 0.0, %v951
        %v953 = vpop.f32.mrb[0].mxu0
        %v954 = vpop.f32.mrb[0].mxu0
        %v955 = vadd.f32 0.0, %v954
        %v956 = vpop.f32.mrb[0].mxu0
        %957 = vmatprep.mubr.bf16.mxu0 0
        %958 = vmatmul.mubr.bf16.gmra.mrb[0].mxu0 %v624
        %v959 = vpop.f32.mrb[0].mxu0
        %v960 = vadd.f32 0.0, %v959
        %v961 = vpop.f32.mrb[0].mxu0
        %v962 = vpop.f32.mrb[0].mxu0
        %v963 = vadd.f32 0.0, %v962
        %v964 = vpop.f32.mrb[0].mxu0
        %965 = vmatprep.mubr.bf16.mxu0 0
        %966 = vmatmul.mubr.bf16.gmra.mrb[0].mxu0 %v625
        %v967 = vpop.f32.mrb[0].mxu0
        %v968 = vadd.f32 0.0, %v967
        %v969 = vpop.f32.mrb[0].mxu0
        %v970 = vpop.f32.mrb[0].mxu0
        %v971 = vadd.f32 0.0, %v970
        %v972 = vpop.f32.mrb[0].mxu0
        %973 = vmatprep.mubr.bf16.mxu0 0
        %974 = vmatmul.mubr.bf16.gmra.mrb[0].mxu0 %v626
        %v975 = vpop.f32.mrb[0].mxu0
        %v976 = vadd.f32 0.0, %v975
        %v977 = vpop.f32.mrb[0].mxu0
        %v978 = vpop.f32.mrb[0].mxu0
        %v979 = vadd.f32 0.0, %v978
        %v980 = vpop.f32.mrb[0].mxu0
        %981 = vmatprep.mubr.bf16.mxu0 0
        %982 = vmatmul.mubr.bf16.gmra.mrb[0].mxu0 %v627
        %v983 = vpop.f32.mrb[0].mxu0
        %v984 = vadd.f32 0.0, %v983
        %v985 = vpop.f32.mrb[0].mxu0
        %v986 = vpop.f32.mrb[0].mxu0
        %v987 = vadd.f32 0.0, %v986
        %v988 = vpop.f32.mrb[0].mxu0
        %989 = vmatprep.mubr.bf16.mxu0 0
        %990 = vmatmul.mubr.bf16.gmra.mrb[0].mxu0 %v628
        %v991 = vpop.f32.mrb[0].mxu0
        %v992 = vadd.f32 0.0, %v991
        %v993 = vpop.f32.mrb[0].mxu0
        %v994 = vpop.f32.mrb[0].mxu0
        %v995 = vadd.f32 0.0, %v994
        %v996 = vpop.f32.mrb[0].mxu0
        %997 = vdwg.mxu0
        %v998 = vadd.f32 %v325, %v744
        %v999 = vadd.f32 %v326, %v747
        %v1000 = vadd.f32 %v327, %v752
        %v1001 = vadd.f32 %v328, %v755
        %v1002 = vadd.f32 %v329, %v760
        %v1003 = vadd.f32 %v330, %v763
        %v1004 = vadd.f32 %v331, %v768
        %v1005 = vadd.f32 %v332, %v771
        %v1006 = vadd.f32 %v333, %v776
        %v1007 = vadd.f32 %v334, %v779
        %v1008 = vadd.f32 %v335, %v784
        %v1009 = vadd.f32 %v336, %v787
        %v1010 = vadd.f32 %v337, %v792
        %v1011 = vadd.f32 %v338, %v795
        %v1012 = vadd.f32 %v339, %v800
        %v1013 = vadd.f32 %v340, %v803
        %v1014 = vadd.f32 %v341, %v808
        %v1015 = vadd.f32 %v342, %v811
        %v1016 = vadd.f32 %v343, %v816
        %v1017 = vadd.f32 %v344, %v819
        %v1018 = vadd.f32 %v345, %v824
        %v1019 = vadd.f32 %v346, %v827
        %v1020 = vadd.f32 %v347, %v832
        %v1021 = vadd.f32 %v348, %v835
        %v1022 = vadd.f32 %v349, %v840
        %v1023 = vadd.f32 %v350, %v843
        %v1024 = vadd.f32 %v351, %v848
        %v1025 = vadd.f32 %v352, %v851
        %v1026 = vadd.f32 %v353, %v856
        %v1027 = vadd.f32 %v354, %v859
        %v1028 = vadd.f32 %v355, %v864
        %v1029 = vadd.f32 %v356, %v867
        %v1030 = vadd.f32 %v357, %v872
        %v1031 = vadd.f32 %v358, %v875
        %v1032 = vadd.f32 %v359, %v880
        %v1033 = vadd.f32 %v360, %v883
        %v1034 = vadd.f32 %v361, %v888
        %v1035 = vadd.f32 %v362, %v891
        %v1036 = vadd.f32 %v363, %v896
        %v1037 = vadd.f32 %v364, %v899
        %v1038 = vadd.f32 %v365, %v904
        %v1039 = vadd.f32 %v366, %v907
        %v1040 = vadd.f32 %v367, %v912
        %v1041 = vadd.f32 %v368, %v915
        %v1042 = vadd.f32 %v369, %v920
        %v1043 = vadd.f32 %v370, %v923
        %v1044 = vadd.f32 %v371, %v928
        %v1045 = vadd.f32 %v372, %v931
        %v1046 = vadd.f32 %v373, %v936
        %v1047 = vadd.f32 %v374, %v939
        %v1048 = vadd.f32 %v375, %v944
        %v1049 = vadd.f32 %v376, %v947
        %v1050 = vadd.f32 %v377, %v952
        %v1051 = vadd.f32 %v378, %v955
        %v1052 = vadd.f32 %v379, %v960
        %v1053 = vadd.f32 %v380, %v963
        %v1054 = vadd.f32 %v381, %v968
        %v1055 = vadd.f32 %v382, %v971
        %v1056 = vadd.f32 %v383, %v976
        %v1057 = vadd.f32 %v384, %v979
        %v1058 = vadd.f32 %v385, %v984
        %v1059 = vadd.f32 %v386, %v987
        %v1060 = vadd.f32 %v387, %v992
        %v1061 = vadd.f32 %v388, %v995
        %1062 = vst [vmem:[#allocation2] sm:$0xff] %v998
        %1063 = vst [vmem:[#allocation2 + $0x8] sm:$0xff] %v999
        %1064 = vst [vmem:[#allocation2 + $0x10] sm:$0xff] %v1000
        %1065 = vst [vmem:[#allocation2 + $0x18] sm:$0xff] %v1001
        %1066 = vst [vmem:[#allocation2 + $0x20] sm:$0xff] %v1002
        %1067 = vst [vmem:[#allocation2 + $0x28] sm:$0xff] %v1003
        %1068 = vst [vmem:[#allocation2 + $0x30] sm:$0xff] %v1004
        %1069 = vst [vmem:[#allocation2 + $0x38] sm:$0xff] %v1005
        %1070 = vst [vmem:[#allocation2 + $0x40] sm:$0xff] %v1006
        %1071 = vst [vmem:[#allocation2 + $0x48] sm:$0xff] %v1007
        %1072 = vst [vmem:[#allocation2 + $0x50] sm:$0xff] %v1008
        %1073 = vst [vmem:[#allocation2 + $0x58] sm:$0xff] %v1009
        %1074 = vst [vmem:[#allocation2 + $0x60] sm:$0xff] %v1010
        %1075 = vst [vmem:[#allocation2 + $0x68] sm:$0xff] %v1011
        %1076 = vst [vmem:[#allocation2 + $0x70] sm:$0xff] %v1012
        %1077 = vst [vmem:[#allocation2 + $0x78] sm:$0xff] %v1013
        %1078 = vst [vmem:[#allocation2 + $0x80] sm:$0xff] %v1014
        %1079 = vst [vmem:[#allocation2 + $0x88] sm:$0xff] %v1015
        %1080 = vst [vmem:[#allocation2 + $0x90] sm:$0xff] %v1016
        %1081 = vst [vmem:[#allocation2 + $0x98] sm:$0xff] %v1017
        %1082 = vst [vmem:[#allocation2 + $0xa0] sm:$0xff] %v1018
        %1083 = vst [vmem:[#allocation2 + $0xa8] sm:$0xff] %v1019
        %1084 = vst [vmem:[#allocation2 + $0xb0] sm:$0xff] %v1020
        %1085 = vst [vmem:[#allocation2 + $0xb8] sm:$0xff] %v1021
        %1086 = vst [vmem:[#allocation2 + $0xc0] sm:$0xff] %v1022
        %1087 = vst [vmem:[#allocation2 + $0xc8] sm:$0xff] %v1023
        %1088 = vst [vmem:[#allocation2 + $0xd0] sm:$0xff] %v1024
        %1089 = vst [vmem:[#allocation2 + $0xd8] sm:$0xff] %v1025
        %1090 = vst [vmem:[#allocation2 + $0xe0] sm:$0xff] %v1026
        %1091 = vst [vmem:[#allocation2 + $0xe8] sm:$0xff] %v1027
        %1092 = vst [vmem:[#allocation2 + $0xf0] sm:$0xff] %v1028
        %1093 = vst [vmem:[#allocation2 + $0xf8] sm:$0xff] %v1029
        %1094 = vst [vmem:[#allocation2 + $0x100] sm:$0xff] %v1030
        %1095 = vst [vmem:[#allocation2 + $0x108] sm:$0xff] %v1031
        %1096 = vst [vmem:[#allocation2 + $0x110] sm:$0xff] %v1032
        %1097 = vst [vmem:[#allocation2 + $0x118] sm:$0xff] %v1033
        %1098 = vst [vmem:[#allocation2 + $0x120] sm:$0xff] %v1034
        %1099 = vst [vmem:[#allocation2 + $0x128] sm:$0xff] %v1035
        %1100 = vst [vmem:[#allocation2 + $0x130] sm:$0xff] %v1036
        %1101 = vst [vmem:[#allocation2 + $0x138] sm:$0xff] %v1037
        %1102 = vst [vmem:[#allocation2 + $0x140] sm:$0xff] %v1038
        %1103 = vst [vmem:[#allocation2 + $0x148] sm:$0xff] %v1039
        %1104 = vst [vmem:[#allocation2 + $0x150] sm:$0xff] %v1040
        %1105 = vst [vmem:[#allocation2 + $0x158] sm:$0xff] %v1041
        %1106 = vst [vmem:[#allocation2 + $0x160] sm:$0xff] %v1042
        %1107 = vst [vmem:[#allocation2 + $0x168] sm:$0xff] %v1043
        %1108 = vst [vmem:[#allocation2 + $0x170] sm:$0xff] %v1044
        %1109 = vst [vmem:[#allocation2 + $0x178] sm:$0xff] %v1045
        %1110 = vst [vmem:[#allocation2 + $0x180] sm:$0xff] %v1046
        %1111 = vst [vmem:[#allocation2 + $0x188] sm:$0xff] %v1047
        %1112 = vst [vmem:[#allocation2 + $0x190] sm:$0xff] %v1048
        %1113 = vst [vmem:[#allocation2 + $0x198] sm:$0xff] %v1049
        %1114 = vst [vmem:[#allocation2 + $0x1a0] sm:$0xff] %v1050
        %1115 = vst [vmem:[#allocation2 + $0x1a8] sm:$0xff] %v1051
        %1116 = vst [vmem:[#allocation2 + $0x1b0] sm:$0xff] %v1052
        %1117 = vst [vmem:[#allocation2 + $0x1b8] sm:$0xff] %v1053
        %1118 = vst [vmem:[#allocation2 + $0x1c0] sm:$0xff] %v1054
        %1119 = vst [vmem:[#allocation2 + $0x1c8] sm:$0xff] %v1055
        %1120 = vst [vmem:[#allocation2 + $0x1d0] sm:$0xff] %v1056
        %1121 = vst [vmem:[#allocation2 + $0x1d8] sm:$0xff] %v1057
        %1122 = vst [vmem:[#allocation2 + $0x1e0] sm:$0xff] %v1058
        %1123 = vst [vmem:[#allocation2 + $0x1e8] sm:$0xff] %v1059
        %1124 = vst [vmem:[#allocation2 + $0x1f0] sm:$0xff] %v1060
        %1125 = vst [vmem:[#allocation2 + $0x1f8] sm:$0xff] %v1061
        // Predicated region
        $region45: #{tpu_custom_call.1} parent=31 // pred_check
          %p1126 = pneg %p257
        $region46: #{tpu_custom_call.1} parent=31 // pred_check_branch
          %1128 = sbr.rel (%p1126) target = $region48
        $region47: #{tpu_custom_call.1} parent=31 // pred_region
          %v1129 = vld [vmem:[#allocation2] sm:$0xff]
          %v1130 = vld [vmem:[#allocation2 + $0x8] sm:$0xff]
          %v1131 = vld [vmem:[#allocation2 + $0x10] sm:$0xff]
          %v1132 = vld [vmem:[#allocation2 + $0x18] sm:$0xff]
          %v1133 = vld [vmem:[#allocation2 + $0x20] sm:$0xff]
          %v1134 = vld [vmem:[#allocation2 + $0x28] sm:$0xff]
          %v1135 = vld [vmem:[#allocation2 + $0x30] sm:$0xff]
          %v1136 = vld [vmem:[#allocation2 + $0x38] sm:$0xff]
          %v1137 = vld [vmem:[#allocation2 + $0x40] sm:$0xff]
          %v1138 = vld [vmem:[#allocation2 + $0x48] sm:$0xff]
          %v1139 = vld [vmem:[#allocation2 + $0x50] sm:$0xff]
          %v1140 = vld [vmem:[#allocation2 + $0x58] sm:$0xff]
          %v1141 = vld [vmem:[#allocation2 + $0x60] sm:$0xff]
          %v1142 = vld [vmem:[#allocation2 + $0x68] sm:$0xff]
          %v1143 = vld [vmem:[#allocation2 + $0x70] sm:$0xff]
          %v1144 = vld [vmem:[#allocation2 + $0x78] sm:$0xff]
          %v1145 = vld [vmem:[#allocation2 + $0x80] sm:$0xff]
          %v1146 = vld [vmem:[#allocation2 + $0x88] sm:$0xff]
          %v1147 = vld [vmem:[#allocation2 + $0x90] sm:$0xff]
          %v1148 = vld [vmem:[#allocation2 + $0x98] sm:$0xff]
          %v1149 = vld [vmem:[#allocation2 + $0xa0] sm:$0xff]
          %v1150 = vld [vmem:[#allocation2 + $0xa8] sm:$0xff]
          %v1151 = vld [vmem:[#allocation2 + $0xb0] sm:$0xff]
          %v1152 = vld [vmem:[#allocation2 + $0xb8] sm:$0xff]
          %v1153 = vld [vmem:[#allocation2 + $0xc0] sm:$0xff]
          %v1154 = vld [vmem:[#allocation2 + $0xc8] sm:$0xff]
          %v1155 = vld [vmem:[#allocation2 + $0xd0] sm:$0xff]
          %v1156 = vld [vmem:[#allocation2 + $0xd8] sm:$0xff]
          %v1157 = vld [vmem:[#allocation2 + $0xe0] sm:$0xff]
          %v1158 = vld [vmem:[#allocation2 + $0xe8] sm:$0xff]
          %v1159 = vld [vmem:[#allocation2 + $0xf0] sm:$0xff]
          %v1160 = vld [vmem:[#allocation2 + $0xf8] sm:$0xff]
          %v1161 = vld [vmem:[#allocation2 + $0x100] sm:$0xff]
          %v1162 = vld [vmem:[#allocation2 + $0x108] sm:$0xff]
          %v1163 = vld [vmem:[#allocation2 + $0x110] sm:$0xff]
          %v1164 = vld [vmem:[#allocation2 + $0x118] sm:$0xff]
          %v1165 = vld [vmem:[#allocation2 + $0x120] sm:$0xff]
          %v1166 = vld [vmem:[#allocation2 + $0x128] sm:$0xff]
          %v1167 = vld [vmem:[#allocation2 + $0x130] sm:$0xff]
          %v1168 = vld [vmem:[#allocation2 + $0x138] sm:$0xff]
          %v1169 = vld [vmem:[#allocation2 + $0x140] sm:$0xff]
          %v1170 = vld [vmem:[#allocation2 + $0x148] sm:$0xff]
          %v1171 = vld [vmem:[#allocation2 + $0x150] sm:$0xff]
          %v1172 = vld [vmem:[#allocation2 + $0x158] sm:$0xff]
          %v1173 = vld [vmem:[#allocation2 + $0x160] sm:$0xff]
          %v1174 = vld [vmem:[#allocation2 + $0x168] sm:$0xff]
          %v1175 = vld [vmem:[#allocation2 + $0x170] sm:$0xff]
          %v1176 = vld [vmem:[#allocation2 + $0x178] sm:$0xff]
          %v1177 = vld [vmem:[#allocation2 + $0x180] sm:$0xff]
          %v1178 = vld [vmem:[#allocation2 + $0x188] sm:$0xff]
          %v1179 = vld [vmem:[#allocation2 + $0x190] sm:$0xff]
          %v1180 = vld [vmem:[#allocation2 + $0x198] sm:$0xff]
          %v1181 = vld [vmem:[#allocation2 + $0x1a0] sm:$0xff]
          %v1182 = vld [vmem:[#allocation2 + $0x1a8] sm:$0xff]
          %v1183 = vld [vmem:[#allocation2 + $0x1b0] sm:$0xff]
          %v1184 = vld [vmem:[#allocation2 + $0x1b8] sm:$0xff]
          %v1185 = vld [vmem:[#allocation2 + $0x1c0] sm:$0xff]
          %v1186 = vld [vmem:[#allocation2 + $0x1c8] sm:$0xff]
          %v1187 = vld [vmem:[#allocation2 + $0x1d0] sm:$0xff]
          %v1188 = vld [vmem:[#allocation2 + $0x1d8] sm:$0xff]
          %v1189 = vld [vmem:[#allocation2 + $0x1e0] sm:$0xff]
          %v1190 = vld [vmem:[#allocation2 + $0x1e8] sm:$0xff]
          %v1191 = vld [vmem:[#allocation2 + $0x1f0] sm:$0xff]
          %v1192 = vld [vmem:[#allocation2 + $0x1f8] sm:$0xff]
          %v1193 = vld [vmem:[%s254] sm:$0x1]
          %v1195 = vlaneseq
          %v1196 = vshrl.u32 %v1195, 7
          %v1197 = vsub.s32 0, %v1196
          %v1198 = vrot.slane %v1193, %v1197
          %v1200 = vadd.f32 %v1129, %v1198
          %v1201 = vadd.f32 %v1130, %v1198
          %v1202 = vadd.f32 %v1131, %v1198
          %v1203 = vadd.f32 %v1132, %v1198
          %v1204 = vadd.f32 %v1133, %v1198
          %v1205 = vadd.f32 %v1134, %v1198
          %v1206 = vadd.f32 %v1135, %v1198
          %v1207 = vadd.f32 %v1136, %v1198
          %v1208 = vadd.f32 %v1137, %v1198
          %v1209 = vadd.f32 %v1138, %v1198
          %v1210 = vadd.f32 %v1139, %v1198
          %v1211 = vadd.f32 %v1140, %v1198
          %v1212 = vadd.f32 %v1141, %v1198
          %v1213 = vadd.f32 %v1142, %v1198
          %v1214 = vadd.f32 %v1143, %v1198
          %v1215 = vadd.f32 %v1144, %v1198
          %v1216 = vadd.f32 %v1145, %v1198
          %v1217 = vadd.f32 %v1146, %v1198
          %v1218 = vadd.f32 %v1147, %v1198
          %v1219 = vadd.f32 %v1148, %v1198
          %v1220 = vadd.f32 %v1149, %v1198
          %v1221 = vadd.f32 %v1150, %v1198
          %v1222 = vadd.f32 %v1151, %v1198
          %v1223 = vadd.f32 %v1152, %v1198
          %v1224 = vadd.f32 %v1153, %v1198
          %v1225 = vadd.f32 %v1154, %v1198
          %v1226 = vadd.f32 %v1155, %v1198
          %v1227 = vadd.f32 %v1156, %v1198
          %v1228 = vadd.f32 %v1157, %v1198
          %v1229 = vadd.f32 %v1158, %v1198
          %v1230 = vadd.f32 %v1159, %v1198
          %v1231 = vadd.f32 %v1160, %v1198
          %v1232 = vadd.f32 %v1161, %v1198
          %v1233 = vadd.f32 %v1162, %v1198
          %v1234 = vadd.f32 %v1163, %v1198
          %v1235 = vadd.f32 %v1164, %v1198
          %v1236 = vadd.f32 %v1165, %v1198
          %v1237 = vadd.f32 %v1166, %v1198
          %v1238 = vadd.f32 %v1167, %v1198
          %v1239 = vadd.f32 %v1168, %v1198
          %v1240 = vadd.f32 %v1169, %v1198
          %v1241 = vadd.f32 %v1170, %v1198
          %v1242 = vadd.f32 %v1171, %v1198
          %v1243 = vadd.f32 %v1172, %v1198
          %v1244 = vadd.f32 %v1173, %v1198
          %v1245 = vadd.f32 %v1174, %v1198
          %v1246 = vadd.f32 %v1175, %v1198
          %v1247 = vadd.f32 %v1176, %v1198
          %v1248 = vadd.f32 %v1177, %v1198
          %v1249 = vadd.f32 %v1178, %v1198
          %v1250 = vadd.f32 %v1179, %v1198
          %v1251 = vadd.f32 %v1180, %v1198
          %v1252 = vadd.f32 %v1181, %v1198
          %v1253 = vadd.f32 %v1182, %v1198
          %v1254 = vadd.f32 %v1183, %v1198
          %v1255 = vadd.f32 %v1184, %v1198
          %v1256 = vadd.f32 %v1185, %v1198
          %v1257 = vadd.f32 %v1186, %v1198
          %v1258 = vadd.f32 %v1187, %v1198
          %v1259 = vadd.f32 %v1188, %v1198
          %v1260 = vadd.f32 %v1189, %v1198
          %v1261 = vadd.f32 %v1190, %v1198
          %v1262 = vadd.f32 %v1191, %v1198
          %v1263 = vadd.f32 %v1192, %v1198
          %v1264 = vmul.f32 %v1200, %v1200
          %v1265 = vmul.f32 %v1201, %v1201
          %v1266 = vmul.f32 %v1202, %v1202
          %v1267 = vmul.f32 %v1203, %v1203
          %v1268 = vmul.f32 %v1204, %v1204
          %v1269 = vmul.f32 %v1205, %v1205
          %v1270 = vmul.f32 %v1206, %v1206
          %v1271 = vmul.f32 %v1207, %v1207
          %v1272 = vmul.f32 %v1208, %v1208
          %v1273 = vmul.f32 %v1209, %v1209
          %v1274 = vmul.f32 %v1210, %v1210
          %v1275 = vmul.f32 %v1211, %v1211
          %v1276 = vmul.f32 %v1212, %v1212
          %v1277 = vmul.f32 %v1213, %v1213
          %v1278 = vmul.f32 %v1214, %v1214
          %v1279 = vmul.f32 %v1215, %v1215
          %v1280 = vmul.f32 %v1216, %v1216
          %v1281 = vmul.f32 %v1217, %v1217
          %v1282 = vmul.f32 %v1218, %v1218
          %v1283 = vmul.f32 %v1219, %v1219
          %v1284 = vmul.f32 %v1220, %v1220
          %v1285 = vmul.f32 %v1221, %v1221
          %v1286 = vmul.f32 %v1222, %v1222
          %v1287 = vmul.f32 %v1223, %v1223
          %v1288 = vmul.f32 %v1224, %v1224
          %v1289 = vmul.f32 %v1225, %v1225
          %v1290 = vmul.f32 %v1226, %v1226
          %v1291 = vmul.f32 %v1227, %v1227
          %v1292 = vmul.f32 %v1228, %v1228
          %v1293 = vmul.f32 %v1229, %v1229
          %v1294 = vmul.f32 %v1230, %v1230
          %v1295 = vmul.f32 %v1231, %v1231
          %v1296 = vmul.f32 %v1232, %v1232
          %v1297 = vmul.f32 %v1233, %v1233
          %v1298 = vmul.f32 %v1234, %v1234
          %v1299 = vmul.f32 %v1235, %v1235
          %v1300 = vmul.f32 %v1236, %v1236
          %v1301 = vmul.f32 %v1237, %v1237
          %v1302 = vmul.f32 %v1238, %v1238
          %v1303 = vmul.f32 %v1239, %v1239
          %v1304 = vmul.f32 %v1240, %v1240
          %v1305 = vmul.f32 %v1241, %v1241
          %v1306 = vmul.f32 %v1242, %v1242
          %v1307 = vmul.f32 %v1243, %v1243
          %v1308 = vmul.f32 %v1244, %v1244
          %v1309 = vmul.f32 %v1245, %v1245
          %v1310 = vmul.f32 %v1246, %v1246
          %v1311 = vmul.f32 %v1247, %v1247
          %v1312 = vmul.f32 %v1248, %v1248
          %v1313 = vmul.f32 %v1249, %v1249
          %v1314 = vmul.f32 %v1250, %v1250
          %v1315 = vmul.f32 %v1251, %v1251
          %v1316 = vmul.f32 %v1252, %v1252
          %v1317 = vmul.f32 %v1253, %v1253
          %v1318 = vmul.f32 %v1254, %v1254
          %v1319 = vmul.f32 %v1255, %v1255
          %v1320 = vmul.f32 %v1256, %v1256
          %v1321 = vmul.f32 %v1257, %v1257
          %v1322 = vmul.f32 %v1258, %v1258
          %v1323 = vmul.f32 %v1259, %v1259
          %v1324 = vmul.f32 %v1260, %v1260
          %v1325 = vmul.f32 %v1261, %v1261
          %v1326 = vmul.f32 %v1262, %v1262
          %v1327 = vmul.f32 %v1263, %v1263
          %v1328 = vmul.f32 %v1200, %v1264
          %v1329 = vmul.f32 %v1201, %v1265
          %v1330 = vmul.f32 %v1202, %v1266
          %v1331 = vmul.f32 %v1203, %v1267
          %v1332 = vmul.f32 %v1204, %v1268
          %v1333 = vmul.f32 %v1205, %v1269
          %v1334 = vmul.f32 %v1206, %v1270
          %v1335 = vmul.f32 %v1207, %v1271
          %v1336 = vmul.f32 %v1208, %v1272
          %v1337 = vmul.f32 %v1209, %v1273
          %v1338 = vmul.f32 %v1210, %v1274
          %v1339 = vmul.f32 %v1211, %v1275
          %v1340 = vmul.f32 %v1212, %v1276
          %v1341 = vmul.f32 %v1213, %v1277
          %v1342 = vmul.f32 %v1214, %v1278
          %v1343 = vmul.f32 %v1215, %v1279
          %v1344 = vmul.f32 %v1216, %v1280
          %v1345 = vmul.f32 %v1217, %v1281
          %v1346 = vmul.f32 %v1218, %v1282
          %v1347 = vmul.f32 %v1219, %v1283
          %v1348 = vmul.f32 %v1220, %v1284
          %v1349 = vmul.f32 %v1221, %v1285
          %v1350 = vmul.f32 %v1222, %v1286
          %v1351 = vmul.f32 %v1223, %v1287
          %v1352 = vmul.f32 %v1224, %v1288
          %v1353 = vmul.f32 %v1225, %v1289
          %v1354 = vmul.f32 %v1226, %v1290
          %v1355 = vmul.f32 %v1227, %v1291
          %v1356 = vmul.f32 %v1228, %v1292
          %v1357 = vmul.f32 %v1229, %v1293
          %v1358 = vmul.f32 %v1230, %v1294
          %v1359 = vmul.f32 %v1231, %v1295
          %v1360 = vmul.f32 %v1232, %v1296
          %v1361 = vmul.f32 %v1233, %v1297
          %v1362 = vmul.f32 %v1234, %v1298
          %v1363 = vmul.f32 %v1235, %v1299
          %v1364 = vmul.f32 %v1236, %v1300
          %v1365 = vmul.f32 %v1237, %v1301
          %v1366 = vmul.f32 %v1238, %v1302
          %v1367 = vmul.f32 %v1239, %v1303
          %v1368 = vmul.f32 %v1240, %v1304
          %v1369 = vmul.f32 %v1241, %v1305
          %v1370 = vmul.f32 %v1242, %v1306
          %v1371 = vmul.f32 %v1243, %v1307
          %v1372 = vmul.f32 %v1244, %v1308
          %v1373 = vmul.f32 %v1245, %v1309
          %v1374 = vmul.f32 %v1246, %v1310
          %v1375 = vmul.f32 %v1247, %v1311
          %v1376 = vmul.f32 %v1248, %v1312
          %v1377 = vmul.f32 %v1249, %v1313
          %v1378 = vmul.f32 %v1250, %v1314
          %v1379 = vmul.f32 %v1251, %v1315
          %v1380 = vmul.f32 %v1252, %v1316
          %v1381 = vmul.f32 %v1253, %v1317
          %v1382 = vmul.f32 %v1254, %v1318
          %v1383 = vmul.f32 %v1255, %v1319
          %v1384 = vmul.f32 %v1256, %v1320
          %v1385 = vmul.f32 %v1257, %v1321
          %v1386 = vmul.f32 %v1258, %v1322
          %v1387 = vmul.f32 %v1259, %v1323
          %v1388 = vmul.f32 %v1260, %v1324
          %v1389 = vmul.f32 %v1261, %v1325
          %v1390 = vmul.f32 %v1262, %v1326
          %v1391 = vmul.f32 %v1263, %v1327
          %v1392 = vmul.f32 %v1328, 0.044715
          %v1393 = vmul.f32 %v1329, 0.044715
          %v1394 = vmul.f32 %v1330, 0.044715
          %v1395 = vmul.f32 %v1331, 0.044715
          %v1396 = vmul.f32 %v1332, 0.044715
          %v1397 = vmul.f32 %v1333, 0.044715
          %v1398 = vmul.f32 %v1334, 0.044715
          %v1399 = vmul.f32 %v1335, 0.044715
          %v1400 = vmul.f32 %v1336, 0.044715
          %v1401 = vmul.f32 %v1337, 0.044715
          %v1402 = vmul.f32 %v1338, 0.044715
          %v1403 = vmul.f32 %v1339, 0.044715
          %v1404 = vmul.f32 %v1340, 0.044715
          %v1405 = vmul.f32 %v1341, 0.044715
          %v1406 = vmul.f32 %v1342, 0.044715
          %v1407 = vmul.f32 %v1343, 0.044715
          %v1408 = vmul.f32 %v1344, 0.044715
          %v1409 = vmul.f32 %v1345, 0.044715
          %v1410 = vmul.f32 %v1346, 0.044715
          %v1411 = vmul.f32 %v1347, 0.044715
          %v1412 = vmul.f32 %v1348, 0.044715
          %v1413 = vmul.f32 %v1349, 0.044715
          %v1414 = vmul.f32 %v1350, 0.044715
          %v1415 = vmul.f32 %v1351, 0.044715
          %v1416 = vmul.f32 %v1352, 0.044715
          %v1417 = vmul.f32 %v1353, 0.044715
          %v1418 = vmul.f32 %v1354, 0.044715
          %v1419 = vmul.f32 %v1355, 0.044715
          %v1420 = vmul.f32 %v1356, 0.044715
          %v1421 = vmul.f32 %v1357, 0.044715
          %v1422 = vmul.f32 %v1358, 0.044715
          %v1423 = vmul.f32 %v1359, 0.044715
          %v1424 = vmul.f32 %v1360, 0.044715
          %v1425 = vmul.f32 %v1361, 0.044715
          %v1426 = vmul.f32 %v1362, 0.044715
          %v1427 = vmul.f32 %v1363, 0.044715
          %v1428 = vmul.f32 %v1364, 0.044715
          %v1429 = vmul.f32 %v1365, 0.044715
          %v1430 = vmul.f32 %v1366, 0.044715
          %v1431 = vmul.f32 %v1367, 0.044715
          %v1432 = vmul.f32 %v1368, 0.044715
          %v1433 = vmul.f32 %v1369, 0.044715
          %v1434 = vmul.f32 %v1370, 0.044715
          %v1435 = vmul.f32 %v1371, 0.044715
          %v1436 = vmul.f32 %v1372, 0.044715
          %v1437 = vmul.f32 %v1373, 0.044715
          %v1438 = vmul.f32 %v1374, 0.044715
          %v1439 = vmul.f32 %v1375, 0.044715
          %v1440 = vmul.f32 %v1376, 0.044715
          %v1441 = vmul.f32 %v1377, 0.044715
          %v1442 = vmul.f32 %v1378, 0.044715
          %v1443 = vmul.f32 %v1379, 0.044715
          %v1444 = vmul.f32 %v1380, 0.044715
          %v1445 = vmul.f32 %v1381, 0.044715
          %v1446 = vmul.f32 %v1382, 0.044715
          %v1447 = vmul.f32 %v1383, 0.044715
          %v1448 = vmul.f32 %v1384, 0.044715
          %v1449 = vmul.f32 %v1385, 0.044715
          %v1450 = vmul.f32 %v1386, 0.044715
          %v1451 = vmul.f32 %v1387, 0.044715
          %v1452 = vmul.f32 %v1388, 0.044715
          %v1453 = vmul.f32 %v1389, 0.044715
          %v1454 = vmul.f32 %v1390, 0.044715
          %v1455 = vmul.f32 %v1391, 0.044715
          %v1456 = vadd.f32 %v1200, %v1392
          %v1457 = vadd.f32 %v1201, %v1393
          %v1458 = vadd.f32 %v1202, %v1394
          %v1459 = vadd.f32 %v1203, %v1395
          %v1460 = vadd.f32 %v1204, %v1396
          %v1461 = vadd.f32 %v1205, %v1397
          %v1462 = vadd.f32 %v1206, %v1398
          %v1463 = vadd.f32 %v1207, %v1399
          %v1464 = vadd.f32 %v1208, %v1400
          %v1465 = vadd.f32 %v1209, %v1401
          %v1466 = vadd.f32 %v1210, %v1402
          %v1467 = vadd.f32 %v1211, %v1403
          %v1468 = vadd.f32 %v1212, %v1404
          %v1469 = vadd.f32 %v1213, %v1405
          %v1470 = vadd.f32 %v1214, %v1406
          %v1471 = vadd.f32 %v1215, %v1407
          %v1472 = vadd.f32 %v1216, %v1408
          %v1473 = vadd.f32 %v1217, %v1409
          %v1474 = vadd.f32 %v1218, %v1410
          %v1475 = vadd.f32 %v1219, %v1411
          %v1476 = vadd.f32 %v1220, %v1412
          %v1477 = vadd.f32 %v1221, %v1413
          %v1478 = vadd.f32 %v1222, %v1414
          %v1479 = vadd.f32 %v1223, %v1415
          %v1480 = vadd.f32 %v1224, %v1416
          %v1481 = vadd.f32 %v1225, %v1417
          %v1482 = vadd.f32 %v1226, %v1418
          %v1483 = vadd.f32 %v1227, %v1419
          %v1484 = vadd.f32 %v1228, %v1420
          %v1485 = vadd.f32 %v1229, %v1421
          %v1486 = vadd.f32 %v1230, %v1422
          %v1487 = vadd.f32 %v1231, %v1423
          %v1488 = vadd.f32 %v1232, %v1424
          %v1489 = vadd.f32 %v1233, %v1425
          %v1490 = vadd.f32 %v1234, %v1426
          %v1491 = vadd.f32 %v1235, %v1427
          %v1492 = vadd.f32 %v1236, %v1428
          %v1493 = vadd.f32 %v1237, %v1429
          %v1494 = vadd.f32 %v1238, %v1430
          %v1495 = vadd.f32 %v1239, %v1431
          %v1496 = vadd.f32 %v1240, %v1432
          %v1497 = vadd.f32 %v1241, %v1433
          %v1498 = vadd.f32 %v1242, %v1434
          %v1499 = vadd.f32 %v1243, %v1435
          %v1500 = vadd.f32 %v1244, %v1436
          %v1501 = vadd.f32 %v1245, %v1437
          %v1502 = vadd.f32 %v1246, %v1438
          %v1503 = vadd.f32 %v1247, %v1439
          %v1504 = vadd.f32 %v1248, %v1440
          %v1505 = vadd.f32 %v1249, %v1441
          %v1506 = vadd.f32 %v1250, %v1442
          %v1507 = vadd.f32 %v1251, %v1443
          %v1508 = vadd.f32 %v1252, %v1444
          %v1509 = vadd.f32 %v1253, %v1445
          %v1510 = vadd.f32 %v1254, %v1446
          %v1511 = vadd.f32 %v1255, %v1447
          %v1512 = vadd.f32 %v1256, %v1448
          %v1513 = vadd.f32 %v1257, %v1449
          %v1514 = vadd.f32 %v1258, %v1450
          %v1515 = vadd.f32 %v1259, %v1451
          %v1516 = vadd.f32 %v1260, %v1452
          %v1517 = vadd.f32 %v1261, %v1453
          %v1518 = vadd.f32 %v1262, %v1454
          %v1519 = vadd.f32 %v1263, %v1455
          %v1520 = vmul.f32 %v1456, 0.7978846
          %v1521 = vmul.f32 %v1457, 0.7978846
          %v1522 = vmul.f32 %v1458, 0.7978846
          %v1523 = vmul.f32 %v1459, 0.7978846
          %v1524 = vmul.f32 %v1460, 0.7978846
          %v1525 = vmul.f32 %v1461, 0.7978846
          %v1526 = vmul.f32 %v1462, 0.7978846
          %v1527 = vmul.f32 %v1463, 0.7978846
          %v1528 = vmul.f32 %v1464, 0.7978846
          %v1529 = vmul.f32 %v1465, 0.7978846
          %v1530 = vmul.f32 %v1466, 0.7978846
          %v1531 = vmul.f32 %v1467, 0.7978846
          %v1532 = vmul.f32 %v1468, 0.7978846
          %v1533 = vmul.f32 %v1469, 0.7978846
          %v1534 = vmul.f32 %v1470, 0.7978846
          %v1535 = vmul.f32 %v1471, 0.7978846
          %v1536 = vmul.f32 %v1472, 0.7978846
          %v1537 = vmul.f32 %v1473, 0.7978846
          %v1538 = vmul.f32 %v1474, 0.7978846
          %v1539 = vmul.f32 %v1475, 0.7978846
          %v1540 = vmul.f32 %v1476, 0.7978846
          %v1541 = vmul.f32 %v1477, 0.7978846
          %v1542 = vmul.f32 %v1478, 0.7978846
          %v1543 = vmul.f32 %v1479, 0.7978846
          %v1544 = vmul.f32 %v1480, 0.7978846
          %v1545 = vmul.f32 %v1481, 0.7978846
          %v1546 = vmul.f32 %v1482, 0.7978846
          %v1547 = vmul.f32 %v1483, 0.7978846
          %v1548 = vmul.f32 %v1484, 0.7978846
          %v1549 = vmul.f32 %v1485, 0.7978846
          %v1550 = vmul.f32 %v1486, 0.7978846
          %v1551 = vmul.f32 %v1487, 0.7978846
          %v1552 = vmul.f32 %v1488, 0.7978846
          %v1553 = vmul.f32 %v1489, 0.7978846
          %v1554 = vmul.f32 %v1490, 0.7978846
          %v1555 = vmul.f32 %v1491, 0.7978846
          %v1556 = vmul.f32 %v1492, 0.7978846
          %v1557 = vmul.f32 %v1493, 0.7978846
          %v1558 = vmul.f32 %v1494, 0.7978846
          %v1559 = vmul.f32 %v1495, 0.7978846
          %v1560 = vmul.f32 %v1496, 0.7978846
          %v1561 = vmul.f32 %v1497, 0.7978846
          %v1562 = vmul.f32 %v1498, 0.7978846
          %v1563 = vmul.f32 %v1499, 0.7978846
          %v1564 = vmul.f32 %v1500, 0.7978846
          %v1565 = vmul.f32 %v1501, 0.7978846
          %v1566 = vmul.f32 %v1502, 0.7978846
          %v1567 = vmul.f32 %v1503, 0.7978846
          %v1568 = vmul.f32 %v1504, 0.7978846
          %v1569 = vmul.f32 %v1505, 0.7978846
          %v1570 = vmul.f32 %v1506, 0.7978846
          %v1571 = vmul.f32 %v1507, 0.7978846
          %v1572 = vmul.f32 %v1508, 0.7978846
          %v1573 = vmul.f32 %v1509, 0.7978846
          %v1574 = vmul.f32 %v1510, 0.7978846
          %v1575 = vmul.f32 %v1511, 0.7978846
          %v1576 = vmul.f32 %v1512, 0.7978846
          %v1577 = vmul.f32 %v1513, 0.7978846
          %v1578 = vmul.f32 %v1514, 0.7978846
          %v1579 = vmul.f32 %v1515, 0.7978846
          %v1580 = vmul.f32 %v1516, 0.7978846
          %v1581 = vmul.f32 %v1517, 0.7978846
          %v1582 = vmul.f32 %v1518, 0.7978846
          %v1583 = vmul.f32 %v1519, 0.7978846
          %v1584 = vtanh.pop %v1520
          %v1585 = vtanh.pop %v1521
          %v1586 = vtanh.pop %v1522
          %v1587 = vtanh.pop %v1523
          %v1588 = vtanh.pop %v1524
          %v1589 = vtanh.pop %v1525
          %v1590 = vtanh.pop %v1526
          %v1591 = vtanh.pop %v1527
          %v1592 = vtanh.pop %v1528
          %v1593 = vtanh.pop %v1529
          %v1594 = vtanh.pop %v1530
          %v1595 = vtanh.pop %v1531
          %v1596 = vtanh.pop %v1532
          %v1597 = vtanh.pop %v1533
          %v1598 = vtanh.pop %v1534
          %v1599 = vtanh.pop %v1535
          %v1600 = vtanh.pop %v1536
          %v1601 = vtanh.pop %v1537
          %v1602 = vtanh.pop %v1538
          %v1603 = vtanh.pop %v1539
          %v1604 = vtanh.pop %v1540
          %v1605 = vtanh.pop %v1541
          %v1606 = vtanh.pop %v1542
          %v1607 = vtanh.pop %v1543
          %v1608 = vtanh.pop %v1544
          %v1609 = vtanh.pop %v1545
          %v1610 = vtanh.pop %v1546
          %v1611 = vtanh.pop %v1547
          %v1612 = vtanh.pop %v1548
          %v1613 = vtanh.pop %v1549
          %v1614 = vtanh.pop %v1550
          %v1615 = vtanh.pop %v1551
          %v1616 = vtanh.pop %v1552
          %v1617 = vtanh.pop %v1553
          %v1618 = vtanh.pop %v1554
          %v1619 = vtanh.pop %v1555
          %v1620 = vtanh.pop %v1556
          %v1621 = vtanh.pop %v1557
          %v1622 = vtanh.pop %v1558
          %v1623 = vtanh.pop %v1559
          %v1624 = vtanh.pop %v1560
          %v1625 = vtanh.pop %v1561
          %v1626 = vtanh.pop %v1562
          %v1627 = vtanh.pop %v1563
          %v1628 = vtanh.pop %v1564
          %v1629 = vtanh.pop %v1565
          %v1630 = vtanh.pop %v1566
          %v1631 = vtanh.pop %v1567
          %v1632 = vtanh.pop %v1568
          %v1633 = vtanh.pop %v1569
          %v1634 = vtanh.pop %v1570
          %v1635 = vtanh.pop %v1571
          %v1636 = vtanh.pop %v1572
          %v1637 = vtanh.pop %v1573
          %v1638 = vtanh.pop %v1574
          %v1639 = vtanh.pop %v1575
          %v1640 = vtanh.pop %v1576
          %v1641 = vtanh.pop %v1577
          %v1642 = vtanh.pop %v1578
          %v1643 = vtanh.pop %v1579
          %v1644 = vtanh.pop %v1580
          %v1645 = vtanh.pop %v1581
          %v1646 = vtanh.pop %v1582
          %v1647 = vtanh.pop %v1583
          %v1648 = vadd.f32 %v1584, 1.0
          %v1649 = vadd.f32 %v1585, 1.0
          %v1650 = vadd.f32 %v1586, 1.0
          %v1651 = vadd.f32 %v1587, 1.0
          %v1652 = vadd.f32 %v1588, 1.0
          %v1653 = vadd.f32 %v1589, 1.0
          %v1654 = vadd.f32 %v1590, 1.0
          %v1655 = vadd.f32 %v1591, 1.0
          %v1656 = vadd.f32 %v1592, 1.0
          %v1657 = vadd.f32 %v1593, 1.0
          %v1658 = vadd.f32 %v1594, 1.0
          %v1659 = vadd.f32 %v1595, 1.0
          %v1660 = vadd.f32 %v1596, 1.0
          %v1661 = vadd.f32 %v1597, 1.0
          %v1662 = vadd.f32 %v1598, 1.0
          %v1663 = vadd.f32 %v1599, 1.0
          %v1664 = vadd.f32 %v1600, 1.0
          %v1665 = vadd.f32 %v1601, 1.0
          %v1666 = vadd.f32 %v1602, 1.0
          %v1667 = vadd.f32 %v1603, 1.0
          %v1668 = vadd.f32 %v1604, 1.0
          %v1669 = vadd.f32 %v1605, 1.0
          %v1670 = vadd.f32 %v1606, 1.0
          %v1671 = vadd.f32 %v1607, 1.0
          %v1672 = vadd.f32 %v1608, 1.0
          %v1673 = vadd.f32 %v1609, 1.0
          %v1674 = vadd.f32 %v1610, 1.0
          %v1675 = vadd.f32 %v1611, 1.0
          %v1676 = vadd.f32 %v1612, 1.0
          %v1677 = vadd.f32 %v1613, 1.0
          %v1678 = vadd.f32 %v1614, 1.0
          %v1679 = vadd.f32 %v1615, 1.0
          %v1680 = vadd.f32 %v1616, 1.0
          %v1681 = vadd.f32 %v1617, 1.0
          %v1682 = vadd.f32 %v1618, 1.0
          %v1683 = vadd.f32 %v1619, 1.0
          %v1684 = vadd.f32 %v1620, 1.0
          %v1685 = vadd.f32 %v1621, 1.0
          %v1686 = vadd.f32 %v1622, 1.0
          %v1687 = vadd.f32 %v1623, 1.0
          %v1688 = vadd.f32 %v1624, 1.0
          %v1689 = vadd.f32 %v1625, 1.0
          %v1690 = vadd.f32 %v1626, 1.0
          %v1691 = vadd.f32 %v1627, 1.0
          %v1692 = vadd.f32 %v1628, 1.0
          %v1693 = vadd.f32 %v1629, 1.0
          %v1694 = vadd.f32 %v1630, 1.0
          %v1695 = vadd.f32 %v1631, 1.0
          %v1696 = vadd.f32 %v1632, 1.0
          %v1697 = vadd.f32 %v1633, 1.0
          %v1698 = vadd.f32 %v1634, 1.0
          %v1699 = vadd.f32 %v1635, 1.0
          %v1700 = vadd.f32 %v1636, 1.0
          %v1701 = vadd.f32 %v1637, 1.0
          %v1702 = vadd.f32 %v1638, 1.0
          %v1703 = vadd.f32 %v1639, 1.0
          %v1704 = vadd.f32 %v1640, 1.0
          %v1705 = vadd.f32 %v1641, 1.0
          %v1706 = vadd.f32 %v1642, 1.0
          %v1707 = vadd.f32 %v1643, 1.0
          %v1708 = vadd.f32 %v1644, 1.0
          %v1709 = vadd.f32 %v1645, 1.0
          %v1710 = vadd.f32 %v1646, 1.0
          %v1711 = vadd.f32 %v1647, 1.0
          %v1712 = vmul.f32 %v1648, 0.5
          %v1713 = vmul.f32 %v1649, 0.5
          %v1714 = vmul.f32 %v1650, 0.5
          %v1715 = vmul.f32 %v1651, 0.5
          %v1716 = vmul.f32 %v1652, 0.5
          %v1717 = vmul.f32 %v1653, 0.5
          %v1718 = vmul.f32 %v1654, 0.5
          %v1719 = vmul.f32 %v1655, 0.5
          %v1720 = vmul.f32 %v1656, 0.5
          %v1721 = vmul.f32 %v1657, 0.5
          %v1722 = vmul.f32 %v1658, 0.5
          %v1723 = vmul.f32 %v1659, 0.5
          %v1724 = vmul.f32 %v1660, 0.5
          %v1725 = vmul.f32 %v1661, 0.5
          %v1726 = vmul.f32 %v1662, 0.5
          %v1727 = vmul.f32 %v1663, 0.5
          %v1728 = vmul.f32 %v1664, 0.5
          %v1729 = vmul.f32 %v1665, 0.5
          %v1730 = vmul.f32 %v1666, 0.5
          %v1731 = vmul.f32 %v1667, 0.5
          %v1732 = vmul.f32 %v1668, 0.5
          %v1733 = vmul.f32 %v1669, 0.5
          %v1734 = vmul.f32 %v1670, 0.5
          %v1735 = vmul.f32 %v1671, 0.5
          %v1736 = vmul.f32 %v1672, 0.5
          %v1737 = vmul.f32 %v1673, 0.5
          %v1738 = vmul.f32 %v1674, 0.5
          %v1739 = vmul.f32 %v1675, 0.5
          %v1740 = vmul.f32 %v1676, 0.5
          %v1741 = vmul.f32 %v1677, 0.5
          %v1742 = vmul.f32 %v1678, 0.5
          %v1743 = vmul.f32 %v1679, 0.5
          %v1744 = vmul.f32 %v1680, 0.5
          %v1745 = vmul.f32 %v1681, 0.5
          %v1746 = vmul.f32 %v1682, 0.5
          %v1747 = vmul.f32 %v1683, 0.5
          %v1748 = vmul.f32 %v1684, 0.5
          %v1749 = vmul.f32 %v1685, 0.5
          %v1750 = vmul.f32 %v1686, 0.5
          %v1751 = vmul.f32 %v1687, 0.5
          %v1752 = vmul.f32 %v1688, 0.5
          %v1753 = vmul.f32 %v1689, 0.5
          %v1754 = vmul.f32 %v1690, 0.5
          %v1755 = vmul.f32 %v1691, 0.5
          %v1756 = vmul.f32 %v1692, 0.5
          %v1757 = vmul.f32 %v1693, 0.5
          %v1758 = vmul.f32 %v1694, 0.5
          %v1759 = vmul.f32 %v1695, 0.5
          %v1760 = vmul.f32 %v1696, 0.5
          %v1761 = vmul.f32 %v1697, 0.5
          %v1762 = vmul.f32 %v1698, 0.5
          %v1763 = vmul.f32 %v1699, 0.5
          %v1764 = vmul.f32 %v1700, 0.5
          %v1765 = vmul.f32 %v1701, 0.5
          %v1766 = vmul.f32 %v1702, 0.5
          %v1767 = vmul.f32 %v1703, 0.5
          %v1768 = vmul.f32 %v1704, 0.5
          %v1769 = vmul.f32 %v1705, 0.5
          %v1770 = vmul.f32 %v1706, 0.5
          %v1771 = vmul.f32 %v1707, 0.5
          %v1772 = vmul.f32 %v1708, 0.5
          %v1773 = vmul.f32 %v1709, 0.5
          %v1774 = vmul.f32 %v1710, 0.5
          %v1775 = vmul.f32 %v1711, 0.5
          %v1776 = vmul.f32 %v1200, %v1712
          %v1777 = vmul.f32 %v1201, %v1713
          %v1778 = vmul.f32 %v1202, %v1714
          %v1779 = vmul.f32 %v1203, %v1715
          %v1780 = vmul.f32 %v1204, %v1716
          %v1781 = vmul.f32 %v1205, %v1717
          %v1782 = vmul.f32 %v1206, %v1718
          %v1783 = vmul.f32 %v1207, %v1719
          %v1784 = vmul.f32 %v1208, %v1720
          %v1785 = vmul.f32 %v1209, %v1721
          %v1786 = vmul.f32 %v1210, %v1722
          %v1787 = vmul.f32 %v1211, %v1723
          %v1788 = vmul.f32 %v1212, %v1724
          %v1789 = vmul.f32 %v1213, %v1725
          %v1790 = vmul.f32 %v1214, %v1726
          %v1791 = vmul.f32 %v1215, %v1727
          %v1792 = vmul.f32 %v1216, %v1728
          %v1793 = vmul.f32 %v1217, %v1729
          %v1794 = vmul.f32 %v1218, %v1730
          %v1795 = vmul.f32 %v1219, %v1731
          %v1796 = vmul.f32 %v1220, %v1732
          %v1797 = vmul.f32 %v1221, %v1733
          %v1798 = vmul.f32 %v1222, %v1734
          %v1799 = vmul.f32 %v1223, %v1735
          %v1800 = vmul.f32 %v1224, %v1736
          %v1801 = vmul.f32 %v1225, %v1737
          %v1802 = vmul.f32 %v1226, %v1738
          %v1803 = vmul.f32 %v1227, %v1739
          %v1804 = vmul.f32 %v1228, %v1740
          %v1805 = vmul.f32 %v1229, %v1741
          %v1806 = vmul.f32 %v1230, %v1742
          %v1807 = vmul.f32 %v1231, %v1743
          %v1808 = vmul.f32 %v1232, %v1744
          %v1809 = vmul.f32 %v1233, %v1745
          %v1810 = vmul.f32 %v1234, %v1746
          %v1811 = vmul.f32 %v1235, %v1747
          %v1812 = vmul.f32 %v1236, %v1748
          %v1813 = vmul.f32 %v1237, %v1749
          %v1814 = vmul.f32 %v1238, %v1750
          %v1815 = vmul.f32 %v1239, %v1751
          %v1816 = vmul.f32 %v1240, %v1752
          %v1817 = vmul.f32 %v1241, %v1753
          %v1818 = vmul.f32 %v1242, %v1754
          %v1819 = vmul.f32 %v1243, %v1755
          %v1820 = vmul.f32 %v1244, %v1756
          %v1821 = vmul.f32 %v1245, %v1757
          %v1822 = vmul.f32 %v1246, %v1758
          %v1823 = vmul.f32 %v1247, %v1759
          %v1824 = vmul.f32 %v1248, %v1760
          %v1825 = vmul.f32 %v1249, %v1761
          %v1826 = vmul.f32 %v1250, %v1762
          %v1827 = vmul.f32 %v1251, %v1763
          %v1828 = vmul.f32 %v1252, %v1764
          %v1829 = vmul.f32 %v1253, %v1765
          %v1830 = vmul.f32 %v1254, %v1766
          %v1831 = vmul.f32 %v1255, %v1767
          %v1832 = vmul.f32 %v1256, %v1768
          %v1833 = vmul.f32 %v1257, %v1769
          %v1834 = vmul.f32 %v1258, %v1770
          %v1835 = vmul.f32 %v1259, %v1771
          %v1836 = vmul.f32 %v1260, %v1772
          %v1837 = vmul.f32 %v1261, %v1773
          %v1838 = vmul.f32 %v1262, %v1774
          %v1839 = vmul.f32 %v1263, %v1775
          %v1840 = vpack.c.bf16 %v1777, %v1776
          %v1841 = vpack.c.bf16 %v1779, %v1778
          %v1842 = vpack.c.bf16 %v1781, %v1780
          %v1843 = vpack.c.bf16 %v1783, %v1782
          %v1844 = vpack.c.bf16 %v1785, %v1784
          %v1845 = vpack.c.bf16 %v1787, %v1786
          %v1846 = vpack.c.bf16 %v1789, %v1788
          %v1847 = vpack.c.bf16 %v1791, %v1790
          %v1848 = vpack.c.bf16 %v1793, %v1792
          %v1849 = vpack.c.bf16 %v1795, %v1794
          %v1850 = vpack.c.bf16 %v1797, %v1796
          %v1851 = vpack.c.bf16 %v1799, %v1798
          %v1852 = vpack.c.bf16 %v1801, %v1800
          %v1853 = vpack.c.bf16 %v1803, %v1802
          %v1854 = vpack.c.bf16 %v1805, %v1804
          %v1855 = vpack.c.bf16 %v1807, %v1806
          %v1856 = vpack.c.bf16 %v1809, %v1808
          %v1857 = vpack.c.bf16 %v1811, %v1810
          %v1858 = vpack.c.bf16 %v1813, %v1812
          %v1859 = vpack.c.bf16 %v1815, %v1814
          %v1860 = vpack.c.bf16 %v1817, %v1816
          %v1861 = vpack.c.bf16 %v1819, %v1818
          %v1862 = vpack.c.bf16 %v1821, %v1820
          %v1863 = vpack.c.bf16 %v1823, %v1822
          %v1864 = vpack.c.bf16 %v1825, %v1824
          %v1865 = vpack.c.bf16 %v1827, %v1826
          %v1866 = vpack.c.bf16 %v1829, %v1828
          %v1867 = vpack.c.bf16 %v1831, %v1830
          %v1868 = vpack.c.bf16 %v1833, %v1832
          %v1869 = vpack.c.bf16 %v1835, %v1834
          %v1870 = vpack.c.bf16 %v1837, %v1836
          %v1871 = vpack.c.bf16 %v1839, %v1838
          %v1904 = vunpack.c.l.b16 %v1840
          %v1905 = vunpack.c.h.b16 %v1840
          %v1906 = vunpack.c.l.b16 %v1841
          %v1907 = vunpack.c.h.b16 %v1841
          %v1908 = vunpack.c.l.b16 %v1842
          %v1909 = vunpack.c.h.b16 %v1842
          %v1910 = vunpack.c.l.b16 %v1843
          %v1911 = vunpack.c.h.b16 %v1843
          %v1912 = vunpack.c.l.b16 %v1844
          %v1913 = vunpack.c.h.b16 %v1844
          %v1914 = vunpack.c.l.b16 %v1845
          %v1915 = vunpack.c.h.b16 %v1845
          %v1916 = vunpack.c.l.b16 %v1846
          %v1917 = vunpack.c.h.b16 %v1846
          %v1918 = vunpack.c.l.b16 %v1847
          %v1919 = vunpack.c.h.b16 %v1847
          %v1920 = vunpack.c.l.b16 %v1848
          %v1921 = vunpack.c.h.b16 %v1848
          %v1922 = vunpack.c.l.b16 %v1849
          %v1923 = vunpack.c.h.b16 %v1849
          %v1924 = vunpack.c.l.b16 %v1850
          %v1925 = vunpack.c.h.b16 %v1850
          %v1926 = vunpack.c.l.b16 %v1851
          %v1927 = vunpack.c.h.b16 %v1851
          %v1928 = vunpack.c.l.b16 %v1852
          %v1929 = vunpack.c.h.b16 %v1852
          %v1930 = vunpack.c.l.b16 %v1853
          %v1931 = vunpack.c.h.b16 %v1853
          %v1932 = vunpack.c.l.b16 %v1854
          %v1933 = vunpack.c.h.b16 %v1854
          %v1934 = vunpack.c.l.b16 %v1855
          %v1935 = vunpack.c.h.b16 %v1855
          %v1936 = vunpack.c.l.b16 %v1856
          %v1937 = vunpack.c.h.b16 %v1856
          %v1938 = vunpack.c.l.b16 %v1857
          %v1939 = vunpack.c.h.b16 %v1857
          %v1940 = vunpack.c.l.b16 %v1858
          %v1941 = vunpack.c.h.b16 %v1858
          %v1942 = vunpack.c.l.b16 %v1859
          %v1943 = vunpack.c.h.b16 %v1859
          %v1944 = vunpack.c.l.b16 %v1860
          %v1945 = vunpack.c.h.b16 %v1860
          %v1946 = vunpack.c.l.b16 %v1861
          %v1947 = vunpack.c.h.b16 %v1861
          %v1948 = vunpack.c.l.b16 %v1862
          %v1949 = vunpack.c.h.b16 %v1862
          %v1950 = vunpack.c.l.b16 %v1863
          %v1951 = vunpack.c.h.b16 %v1863
          %v1952 = vunpack.c.l.b16 %v1864
          %v1953 = vunpack.c.h.b16 %v1864
          %v1954 = vunpack.c.l.b16 %v1865
          %v1955 = vunpack.c.h.b16 %v1865
          %v1956 = vunpack.c.l.b16 %v1866
          %v1957 = vunpack.c.h.b16 %v1866
          %v1958 = vunpack.c.l.b16 %v1867
          %v1959 = vunpack.c.h.b16 %v1867
          %v1960 = vunpack.c.l.b16 %v1868
          %v1961 = vunpack.c.h.b16 %v1868
          %v1962 = vunpack.c.l.b16 %v1869
          %v1963 = vunpack.c.h.b16 %v1869
          %v1964 = vunpack.c.l.b16 %v1870
          %v1965 = vunpack.c.h.b16 %v1870
          %v1966 = vunpack.c.l.b16 %v1871
          %v1967 = vunpack.c.h.b16 %v1871
          %v1968 = vpack.c.b16 %v1904, %v1904
          %v1969 = vpack.c.b16 %v1905, %v1905
          %v1970 = vpack.c.b16 %v1906, %v1906
          %v1971 = vpack.c.b16 %v1907, %v1907
          %v1972 = vpack.c.b16 %v1908, %v1908
          %v1973 = vpack.c.b16 %v1909, %v1909
          %v1974 = vpack.c.b16 %v1910, %v1910
          %v1975 = vpack.c.b16 %v1911, %v1911
          %v1976 = vpack.c.b16 %v1912, %v1912
          %v1977 = vpack.c.b16 %v1913, %v1913
          %v1978 = vpack.c.b16 %v1914, %v1914
          %v1979 = vpack.c.b16 %v1915, %v1915
          %v1980 = vpack.c.b16 %v1916, %v1916
          %v1981 = vpack.c.b16 %v1917, %v1917
          %v1982 = vpack.c.b16 %v1918, %v1918
          %v1983 = vpack.c.b16 %v1919, %v1919
          %v1984 = vpack.c.b16 %v1920, %v1920
          %v1985 = vpack.c.b16 %v1921, %v1921
          %v1986 = vpack.c.b16 %v1922, %v1922
          %v1987 = vpack.c.b16 %v1923, %v1923
          %v1988 = vpack.c.b16 %v1924, %v1924
          %v1989 = vpack.c.b16 %v1925, %v1925
          %v1990 = vpack.c.b16 %v1926, %v1926
          %v1991 = vpack.c.b16 %v1927, %v1927
          %v1992 = vpack.c.b16 %v1928, %v1928
          %v1993 = vpack.c.b16 %v1929, %v1929
          %v1994 = vpack.c.b16 %v1930, %v1930
          %v1995 = vpack.c.b16 %v1931, %v1931
          %v1996 = vpack.c.b16 %v1932, %v1932
          %v1997 = vpack.c.b16 %v1933, %v1933
          %v1998 = vpack.c.b16 %v1934, %v1934
          %v1999 = vpack.c.b16 %v1935, %v1935
          %v2000 = vpack.c.b16 %v1936, %v1936
          %v2001 = vpack.c.b16 %v1937, %v1937
          %v2002 = vpack.c.b16 %v1938, %v1938
          %v2003 = vpack.c.b16 %v1939, %v1939
          %v2004 = vpack.c.b16 %v1940, %v1940
          %v2005 = vpack.c.b16 %v1941, %v1941
          %v2006 = vpack.c.b16 %v1942, %v1942
          %v2007 = vpack.c.b16 %v1943, %v1943
          %v2008 = vpack.c.b16 %v1944, %v1944
          %v2009 = vpack.c.b16 %v1945, %v1945
          %v2010 = vpack.c.b16 %v1946, %v1946
          %v2011 = vpack.c.b16 %v1947, %v1947
          %v2012 = vpack.c.b16 %v1948, %v1948
          %v2013 = vpack.c.b16 %v1949, %v1949
          %v2014 = vpack.c.b16 %v1950, %v1950
          %v2015 = vpack.c.b16 %v1951, %v1951
          %v2016 = vpack.c.b16 %v1952, %v1952
          %v2017 = vpack.c.b16 %v1953, %v1953
          %v2018 = vpack.c.b16 %v1954, %v1954
          %v2019 = vpack.c.b16 %v1955, %v1955
          %v2020 = vpack.c.b16 %v1956, %v1956
          %v2021 = vpack.c.b16 %v1957, %v1957
          %v2022 = vpack.c.b16 %v1958, %v1958
          %v2023 = vpack.c.b16 %v1959, %v1959
          %v2024 = vpack.c.b16 %v1960, %v1960
          %v2025 = vpack.c.b16 %v1961, %v1961
          %v2026 = vpack.c.b16 %v1962, %v1962
          %v2027 = vpack.c.b16 %v1963, %v1963
          %v2028 = vpack.c.b16 %v1964, %v1964
          %v2029 = vpack.c.b16 %v1965, %v1965
          %v2030 = vpack.c.b16 %v1966, %v1966
          %v2031 = vpack.c.b16 %v1967, %v1967
          %2096 = vst [vmem:[%s249] sm:$0xf] %v1968
          %2097 = vst [vmem:[%s249 + $0x4] sm:$0xf] %v1969
          %2098 = vst [vmem:[%s249 + $0x8] sm:$0xf] %v1970
          %2099 = vst [vmem:[%s249 + $0xc] sm:$0xf] %v1971
          %2100 = vst [vmem:[%s249 + $0x10] sm:$0xf] %v1972
          %2101 = vst [vmem:[%s249 + $0x14] sm:$0xf] %v1973
          %2102 = vst [vmem:[%s249 + $0x18] sm:$0xf] %v1974
          %2103 = vst [vmem:[%s249 + $0x1c] sm:$0xf] %v1975
          %2104 = vst [vmem:[%s249 + $0x20] sm:$0xf] %v1976
          %2105 = vst [vmem:[%s249 + $0x24] sm:$0xf] %v1977
          %2106 = vst [vmem:[%s249 + $0x28] sm:$0xf] %v1978
          %2107 = vst [vmem:[%s249 + $0x2c] sm:$0xf] %v1979
          %2108 = vst [vmem:[%s249 + $0x30] sm:$0xf] %v1980
          %2109 = vst [vmem:[%s249 + $0x34] sm:$0xf] %v1981
          %2110 = vst [vmem:[%s249 + $0x38] sm:$0xf] %v1982
          %2111 = vst [vmem:[%s249 + $0x3c] sm:$0xf] %v1983
          %2112 = vst [vmem:[%s249 + $0x40] sm:$0xf] %v1984
          %2113 = vst [vmem:[%s249 + $0x44] sm:$0xf] %v1985
          %2114 = vst [vmem:[%s249 + $0x48] sm:$0xf] %v1986
          %2115 = vst [vmem:[%s249 + $0x4c] sm:$0xf] %v1987
          %2116 = vst [vmem:[%s249 + $0x50] sm:$0xf] %v1988
          %2117 = vst [vmem:[%s249 + $0x54] sm:$0xf] %v1989
          %2118 = vst [vmem:[%s249 + $0x58] sm:$0xf] %v1990
          %2119 = vst [vmem:[%s249 + $0x5c] sm:$0xf] %v1991
          %2120 = vst [vmem:[%s249 + $0x60] sm:$0xf] %v1992
          %2121 = vst [vmem:[%s249 + $0x64] sm:$0xf] %v1993
          %2122 = vst [vmem:[%s249 + $0x68] sm:$0xf] %v1994
          %2123 = vst [vmem:[%s249 + $0x6c] sm:$0xf] %v1995
          %2124 = vst [vmem:[%s249 + $0x70] sm:$0xf] %v1996
          %2125 = vst [vmem:[%s249 + $0x74] sm:$0xf] %v1997
          %2126 = vst [vmem:[%s249 + $0x78] sm:$0xf] %v1998
          %2127 = vst [vmem:[%s249 + $0x7c] sm:$0xf] %v1999
          %2128 = vst [vmem:[%s249 + $0x80] sm:$0xf] %v2000
          %2129 = vst [vmem:[%s249 + $0x84] sm:$0xf] %v2001
          %2130 = vst [vmem:[%s249 + $0x88] sm:$0xf] %v2002
          %2131 = vst [vmem:[%s249 + $0x8c] sm:$0xf] %v2003
          %2132 = vst [vmem:[%s249 + $0x90] sm:$0xf] %v2004
          %2133 = vst [vmem:[%s249 + $0x94] sm:$0xf] %v2005
          %2134 = vst [vmem:[%s249 + $0x98] sm:$0xf] %v2006
          %2135 = vst [vmem:[%s249 + $0x9c] sm:$0xf] %v2007
          %2136 = vst [vmem:[%s249 + $0xa0] sm:$0xf] %v2008
          %2137 = vst [vmem:[%s249 + $0xa4] sm:$0xf] %v2009
          %2138 = vst [vmem:[%s249 + $0xa8] sm:$0xf] %v2010
          %2139 = vst [vmem:[%s249 + $0xac] sm:$0xf] %v2011
          %2140 = vst [vmem:[%s249 + $0xb0] sm:$0xf] %v2012
          %2141 = vst [vmem:[%s249 + $0xb4] sm:$0xf] %v2013
          %2142 = vst [vmem:[%s249 + $0xb8] sm:$0xf] %v2014
          %2143 = vst [vmem:[%s249 + $0xbc] sm:$0xf] %v2015
          %2144 = vst [vmem:[%s249 + $0xc0] sm:$0xf] %v2016
          %2145 = vst [vmem:[%s249 + $0xc4] sm:$0xf] %v2017
          %2146 = vst [vmem:[%s249 + $0xc8] sm:$0xf] %v2018
          %2147 = vst [vmem:[%s249 + $0xcc] sm:$0xf] %v2019
          %2148 = vst [vmem:[%s249 + $0xd0] sm:$0xf] %v2020
          %2149 = vst [vmem:[%s249 + $0xd4] sm:$0xf] %v2021
          %2150 = vst [vmem:[%s249 + $0xd8] sm:$0xf] %v2022
          %2151 = vst [vmem:[%s249 + $0xdc] sm:$0xf] %v2023
          %2152 = vst [vmem:[%s249 + $0xe0] sm:$0xf] %v2024
          %2153 = vst [vmem:[%s249 + $0xe4] sm:$0xf] %v2025
          %2154 = vst [vmem:[%s249 + $0xe8] sm:$0xf] %v2026
          %2155 = vst [vmem:[%s249 + $0xec] sm:$0xf] %v2027
          %2156 = vst [vmem:[%s249 + $0xf0] sm:$0xf] %v2028
          %2157 = vst [vmem:[%s249 + $0xf4] sm:$0xf] %v2029
          %2158 = vst [vmem:[%s249 + $0xf8] sm:$0xf] %v2030
          %2159 = vst [vmem:[%s249 + $0xfc] sm:$0xf] %v2031
        $region48: #{tpu_custom_call.1} parent=31 // pred_fallthru
          _
        %s2160 = sand.u32 %s132, 1
        %s2161 = scalar_lea.sflag [#allocation5], %s2160
        %s2162 = sand.u32 %s132, 1
        %s2163 = smul.addr %s2162, 256
        %s2164 = scalar_lea.vmem [#allocation8], %s2163
        // Predicated region
        $region49: #{tpu_custom_call.1} parent=31 // pred_check
          %p2165 = pneg %p142
        $region50: #{tpu_custom_call.1} parent=31 // pred_check_branch
          %2167 = sbr.rel (%p2165) target = $region52
        $region51: #{tpu_custom_call.1} parent=31 // pred_region
          %s2168 = smul.u32 64, %s26
          %s2170 = ssub.s32 4096, 4096
          %2171 = vsyncadd %s2161, %s2170
          %s2172 = sadd.s32 %s27, %s2168
          %s2173 = smul.addr %s2172, 64
          %s2174 = scalar_lea.hbm %s3, %s2173
          %s2175 = sshll.u32 %s2164, 4
          %s2176 = int_to_ptr.vmem [resolvable:$true] %s2175
          %2181 = dma.vmem_to_hbm [thread:$0]  %s2176, 4096, %s2174, %s2161, 64, 64, 4
        $region52: #{tpu_custom_call.1} parent=31 // pred_fallthru
          _
      $region32: #{tpu_custom_call.1} parent=5 // pred_fallthru
        _
      %p2182 = scmp.le.s32.totalorder 2, %s16
      // Predicated region
      $region53: #{tpu_custom_call.1} parent=5 // pred_check
        %p2183 = pneg %p2182
      $region54: #{tpu_custom_call.1} parent=5 // pred_check_branch
        %2185 = sbr.rel (%p2183) target = $region56
      $region55: #{tpu_custom_call.1} parent=5 // pred_region
        %s2186 = ssub.s32 %s16, 2
        // Predicated region
        $region57: #{tpu_custom_call.1} parent=55 // pred_check
          %p2187 = pneg %p148
        $region58: #{tpu_custom_call.1} parent=55 // pred_check_branch
          %2189 = sbr.rel (%p2187) target = $region60
        $region59: #{tpu_custom_call.1} parent=55 // pred_region
          %s2190 = sand.u32 %s133, 1
          %s2191 = scalar_lea.sflag [#allocation5], %s2190
          %s2192 = sand.u32 %s133, 1
          %s2193 = smul.addr %s2192, 256
          %s2194 = scalar_lea.vmem [#allocation8], %s2193
          %2195 = dma.done %s2191, 4096
        $region60: #{tpu_custom_call.1} parent=55 // pred_fallthru
          _
      $region56: #{tpu_custom_call.1} parent=5 // pred_fallthru
        _
    $region6: #{tpu_custom_call.1} parent=1 // loop_footer
      %s20 = sadd.s32 1, %s16
    $region7: #{tpu_custom_call.1} parent=1 // loop_footer_branch
      %15 = sbr.rel target = $region3
    $region8: #{tpu_custom_call.1} parent=1 // loop_exit
      _
    %2196 = vsyncpa [#allocation4], 1
    %s2197 = scalar_lea.sflag [#allocation4], 1
    %2198 = vsyncpa %s2197, 1
    %2199 = vsyncpa [#allocation7], 1
    %2200 = vsyncpa [#allocation5], 1
    %s2201 = scalar_lea.sflag [#allocation5], 1
    %2202 = vsyncpa %s2201, 1

</llo_original>
